<compile_context>
chip_gen: v7x
topology: tpu7x:2x2x1
jax: 0.10.0
libtpu: 0.0.40
codegen_flags: <defaults>
</compile_context>

<pallas_src>
import functools

import jax
import jax.numpy as jnp
from jax.experimental import pallas as pl
from jax.experimental.pallas import tpu as pltpu


# ----------------------------- in-kernel math ------------------------------

def _erf(x):
    # Abramowitz & Stegun 7.1.26 (max abs err ~1.5e-7, ~f32 roundoff).
    # TODO(synk): if the bundle dump shows the VALU slot saturating on v5e,
    # switch to tanh-approx GELU (tanh runs on the EUP slot); on v6e/v7x the
    # GELU could alternatively be evaluated in bf16 (packed VALU).
    a1, a2, a3, a4, a5 = 0.254829592, -0.284496736, 1.421413741, -1.453152027, 1.061405429
    p = 0.3275911
    sgn = jnp.where(x >= 0.0, 1.0, -1.0)
    z = jnp.abs(x)
    t = 1.0 / (1.0 + p * z)
    poly = ((((a5 * t + a4) * t + a3) * t + a2) * t + a1) * t
    return sgn * (1.0 - poly * jnp.exp(-z * z))


def _gelu_exact(x):
    # torch.nn.GELU() default (erf form).
    return 0.5 * x * (1.0 + _erf(x * (2.0 ** -0.5)))


def _rmsnorm(x, gamma_scaled):
    # Matches F.normalize(x, dim=-1) * sqrt(dim) * gamma, with gamma_scaled =
    # gamma * sqrt(dim) folded wrapper-side.  rsqrt(max(ss, 1e-24)) equals
    # 1 / max(sqrt(ss), 1e-12) for ss > 1e-24 and runs on the EUP slot.
    ss = jnp.sum(x * x, axis=-1, keepdims=True)
    return x * jax.lax.rsqrt(jnp.maximum(ss, 1e-24)) * gamma_scaled


def _dot_nt(a, b):
    # a: (M, K), b: (N, K) -> (M, N), contracting last axes (no transpose op).
    return jax.lax.dot_general(a, b, (((1,), (1,)), ((), ())),
                               preferred_element_type=jnp.float32)


# --------------------------------- kernel ----------------------------------

def _encoder_kernel(x_ref, cos_ref, sin_ref,
                    g_attn_ref, wq_ref, wk_ref, wv_ref, wo_ref,
                    g_ff_ref, w1_ref, b1_ref, w2_ref, b2_ref,
                    g_out_ref,
                    y_ref,
                    xs_ref, o_scr,
                    *, Bb, N, D, H, dh):
    l = pl.program_id(1)
    half = dh // 2
    hh = H * half
    M = Bb * N

    @pl.when(l == 0)
    def _():
        xs_ref[...] = x_ref[...].astype(jnp.float32)

    x = xs_ref[...].reshape(M, D)                     # running activation, f32

    # Half-width rotary tables, tiled across heads in VMEM.
    # TODO(synk): mark cos/sin/g_out BlockSpecs with pipeline_mode=pl.Buffered(1)
    # to drop their second buffer (marginal VMEM saving).
    cos_h = cos_ref[...]                              # (N, half)
    sin_h = sin_ref[...]
    ct = jnp.concatenate([cos_h] * H, axis=-1)        # (N, H*half)
    st = jnp.concatenate([sin_h] * H, axis=-1)

    # -------------------- attention block (multi-query) --------------------
    hn = _rmsnorm(x, g_attn_ref[0, 0])                # gamma pre-scaled by sqrt(D)
    hb = hn.astype(jnp.bfloat16)
    # Wq columns pre-permuted to [all first halves | all second halves] and
    # pre-scaled by dh**-0.5 (wrapper-side): q comes out rope-ready & scaled.
    q = jnp.dot(hb, wq_ref[0], preferred_element_type=jnp.float32)   # (M, H*dh)
    k = jnp.dot(hb, wk_ref[0], preferred_element_type=jnp.float32)   # (M, dh)
    v = jnp.dot(hb, wv_ref[0], preferred_element_type=jnp.float32)   # (M, dh)

    # RoPE for all heads / batch rows at once (blocked-half convention, i.e.
    # MEGABYTE rotate_half: x1,x2 = chunk(2); out = [x1*c - x2*s, x2*c + x1*s]).
    q3 = q.reshape(Bb, N, H * dh)
    qa, qb = q3[..., :hh], q3[..., hh:]
    q1 = qa * ct[None] - qb * st[None]                # (Bb, N, H*half)
    q2 = qb * ct[None] + qa * st[None]
    k3 = k.reshape(Bb, N, dh)
    ka, kb = k3[..., :half], k3[..., half:]
    k1 = ka * cos_h[None] - kb * sin_h[None]          # (Bb, N, half)
    k2 = kb * cos_h[None] + ka * sin_h[None]
    k_rot = jnp.concatenate([k1, k2], axis=-1).astype(jnp.bfloat16)   # (Bb, N, dh)
    v3 = v.reshape(Bb, N, dh).astype(jnp.bfloat16)

    # Per (batch-row, head) non-causal softmax attention.  bf16 MXU operands,
    # f32 accumulation; per-head outputs land in a preallocated bf16 scratch
    # slice so wo is applied with ONE (M, H*dh) @ (H*dh, D) dot.
    # TODO(synk): compute all heads with one batched matmul and flash-tile the
    # KV axis (online softmax) so the (N, N) score matrix never materializes
    # at large N; on v6e/v7x do the exp in bf16 (EUP bf16) via chip detection.
    for b in range(Bb):
        krb, vb = k_rot[b], v3[b]                     # (N, dh) bf16
        q1b, q2b = q1[b], q2[b]                       # (N, H*half) f32
        for h in range(H):
            c0, c1 = h * half, (h + 1) * half
            q_rot_h = jnp.concatenate(
                [q1b[:, c0:c1], q2b[:, c0:c1]], axis=-1).astype(jnp.bfloat16)
            sim = _dot_nt(q_rot_h, krb)               # (N, N) f32; scale folded in Wq
            sim = sim - jnp.max(sim, axis=-1, keepdims=True)
            p = jnp.exp(sim)                          # f32 exp (portable to v5e)
            # approx reciprocal: ~2^-12 rel error, below the bf16 noise floor.
            p = p * pl.reciprocal(jnp.sum(p, axis=-1, keepdims=True), approx=True)
            o_h = jnp.dot(p.astype(jnp.bfloat16), vb,
                          preferred_element_type=jnp.float32)         # (N, dh)
            o_scr[b * N:(b + 1) * N, h * dh:(h + 1) * dh] = o_h.astype(jnp.bfloat16)

    attn_out = jnp.dot(o_scr[...], wo_ref[0], preferred_element_type=jnp.float32)
    x = x + attn_out                                  # residual

    # --------------------------- feed-forward ------------------------------
    hn = _rmsnorm(x, g_ff_ref[0, 0])
    h1 = jnp.dot(hn.astype(jnp.bfloat16), w1_ref[0],
                 preferred_element_type=jnp.float32) + b1_ref[0, 0]
    h1 = _gelu_exact(h1)
    h2 = jnp.dot(h1.astype(jnp.bfloat16), w2_ref[0],
                 preferred_element_type=jnp.float32) + b2_ref[0, 0]
    x = x + h2                                        # residual

    xs_ref[...] = x.reshape(Bb, N, D)

    @pl.when(l == pl.num_programs(1) - 1)
    def _():
        y_ref[...] = _rmsnorm(x, g_out_ref[0]).reshape(Bb, N, D).astype(y_ref.dtype)


# -------------------------------- wrapper -----------------------------------

def _vmem_capacity_bytes():
    try:
        info = pltpu.get_tpu_info()
        cap = getattr(info, "vmem_capacity_bytes", None)
        if cap:
            return int(cap)
    except Exception:
        pass
    return 64 << 20          # conservative fallback (v7x per-TensorCore VMEM)


def _vmem_estimate(Bb, N, D, H, dh, dff):
    # Rough per-grid-step footprint: double-buffered bf16 weights + scalars,
    # x/y blocks, scratch, half-width tables, in-flight intermediates.
    M = Bb * N
    half = dh // 2
    inner = H * dh
    w_layer = 2 * (D * inner + 2 * D * dh + inner * D + D * dff + dff * D)   # bf16 bytes
    smalls = 4 * (2 * D + dff + 2 * D)
    io_blk = 4 * Bb * N * D
    tables = 4 * N * half * 2
    scratch = 4 * M * D + 2 * M * inner
    interm = 4 * (M * dff + N * N + 2 * M * inner + 3 * M * D) + 2 * M * dff
    return 2 * (w_layer + smalls) + 4 * io_blk + 2 * tables + scratch + interm + (4 << 20)


def _choose_batch_block(B, N, D, H, dh, dff, vmem_cap):
    # Largest divisor of B whose footprint fits in ~75% of VMEM; stop growing
    # once Bb*N >= 256 rows (enough M for the 256-wide v6e/v7x MXU) or the
    # static (b, h) unroll gets too long.
    # TODO(synk): on v7x prefer Bb with (B // Bb) even & >= 2 so the parallel
    # axis splits across both TensorCores; budget VMEM per-TC.
    budget = int(0.75 * vmem_cap)
    best = 1
    for bb in range(1, B + 1):
        if B % bb:
            continue
        if bb * H > 64:
            break
        if bb > 1 and _vmem_estimate(bb, N, D, H, dh, dff) > budget:
            break
        best = bb
        if bb * N >= 256:
            break
    return best


def transformer_encoder(x, params, *, num_heads, head_dim, batch_block=None):
    B, N, D = x.shape
    L = params["wq"].shape[0]
    H, dh = num_heads, head_dim
    assert dh % 2 == 0
    half = dh // 2
    inner = H * dh
    dff = params["w1"].shape[-1]

    vmem_cap = _vmem_capacity_bytes()
    Bb = batch_block if batch_block is not None else _choose_batch_block(
        B, N, D, H, dh, dff, vmem_cap)
    assert B % Bb == 0

    # ---- one-time parameter preprocessing (plain JAX glue) -----------------
    # Permute Wq columns into [all heads' first halves | all heads' second
    # halves] and fold in the attention scale; split Wkv; cast weights to
    # bf16; fold sqrt(D) into the RMSNorm gammas.
    scale = dh ** -0.5
    base = jnp.arange(H)[:, None] * dh + jnp.arange(half)[None, :]
    perm = jnp.concatenate([base.reshape(-1), (base + half).reshape(-1)])
    wq_p = (params["wq"][..., perm] * scale).astype(jnp.bfloat16)      # (L, D, inner)
    wk = params["wkv"][..., :dh].astype(jnp.bfloat16)                  # (L, D, dh)
    wv = params["wkv"][..., dh:].astype(jnp.bfloat16)                  # (L, D, dh)
    wo = params["wo"].astype(jnp.bfloat16)                             # (L, inner, D)
    w1 = params["w1"].astype(jnp.bfloat16)                             # (L, D, dff)
    w2 = params["w2"].astype(jnp.bfloat16)                             # (L, dff, D)
    # TODO(synk): on v7x, store W1/W2 in fp8 with per-channel scales and add a
    # third grid axis that K-tiles dff once double-buffered per-layer bf16
    # weights approach half of the 64 MiB VMEM.
    sqrt_d = jnp.float32(D) ** 0.5
    g_attn = params["g_attn"] * sqrt_d
    g_ff = params["g_ff"] * sqrt_d
    g_out = params["g_out"] * sqrt_d

    # Rotary tables (theta=10000), half-width (N, dh/2); tiled across heads
    # inside the kernel.
    inv_freq = 1.0 / (10000.0 ** (jnp.arange(0, dh, 2, dtype=jnp.float32) / dh))
    t = jnp.arange(N, dtype=jnp.float32)
    freqs = t[:, None] * inv_freq[None, :]             # (N, half)
    ct = jnp.cos(freqs)
    st = jnp.sin(freqs)

    est = _vmem_estimate(Bb, N, D, H, dh, dff)
    vmem_limit = int(min(max(est, 32 << 20), int(vmem_cap * 0.9)))
    # NOTE: for production shapes D, H*dh and dff should be multiples of 128
    # (lane-dense blocks / stores); tiny demo shapes below are Mosaic-padded.

    kernel = functools.partial(_encoder_kernel, Bb=Bb, N=N, D=D, H=H, dh=dh)

    grid_spec = pltpu.PrefetchScalarGridSpec(
        num_scalar_prefetch=0,
        grid=(B // Bb, L),
        in_specs=[
            pl.BlockSpec((Bb, N, D), lambda bi, l: (bi, 0, 0)),        # x
            pl.BlockSpec((N, half), lambda bi, l: (0, 0)),             # cos (half-width)
            pl.BlockSpec((N, half), lambda bi, l: (0, 0)),             # sin (half-width)
            pl.BlockSpec((1, 1, D), lambda bi, l: (l, 0, 0)),          # attn norm gamma
            pl.BlockSpec((1, D, inner), lambda bi, l: (l, 0, 0)),      # Wq (permuted, scaled)
            pl.BlockSpec((1, D, dh), lambda bi, l: (l, 0, 0)),         # Wk
            pl.BlockSpec((1, D, dh), lambda bi, l: (l, 0, 0)),         # Wv
            pl.BlockSpec((1, inner, D), lambda bi, l: (l, 0, 0)),      # Wo
            pl.BlockSpec((1, 1, D), lambda bi, l: (l, 0, 0)),          # ff norm gamma
            pl.BlockSpec((1, D, dff), lambda bi, l: (l, 0, 0)),        # W1
            pl.BlockSpec((1, 1, dff), lambda bi, l: (l, 0, 0)),        # b1
            pl.BlockSpec((1, dff, D), lambda bi, l: (l, 0, 0)),        # W2
            pl.BlockSpec((1, 1, D), lambda bi, l: (l, 0, 0)),          # b2
            pl.BlockSpec((1, D), lambda bi, l: (0, 0)),                # final norm gamma
        ],
        out_specs=pl.BlockSpec((Bb, N, D), lambda bi, l: (bi, 0, 0)),
        scratch_shapes=[pltpu.VMEM((Bb, N, D), jnp.float32),           # layer-carried x
                        pltpu.VMEM((Bb * N, inner), jnp.bfloat16)],    # per-head o slices
    )

    return pl.pallas_call(
        kernel,
        out_shape=jax.ShapeDtypeStruct((B, N, D), x.dtype),
        grid_spec=grid_spec,
        input_output_aliases={0: 0},      # x only read at l==0, y written at l==L-1
        compiler_params=pltpu.CompilerParams(
            dimension_semantics=("parallel", "arbitrary"),
            vmem_limit_bytes=vmem_limit),
    )(x, ct, st,
      g_attn, wq_p, wk, wv, wo,
      g_ff, w1, params["b1"], w2, params["b2"],
      g_out)


# -------------------------- deterministic params ----------------------------

def init_params(key, *, model_dim, num_layers, head_dim, num_heads, ff_mult):
    inner = head_dim * num_heads
    dff = model_dim * ff_mult
    ks = jax.random.split(key, 7)

    def w(k, shape, scale=0.05):
        return scale * jax.random.normal(k, shape, dtype=jnp.float32)

    return dict(
        g_attn=jnp.ones((num_layers, 1, model_dim), jnp.float32),   # RMSNorm gamma
        wq=w(ks[0], (num_layers, model_dim, inner)),
        wkv=w(ks[1], (num_layers, model_dim, 2 * head_dim)),
        wo=w(ks[2], (num_layers, inner, model_dim)),
        g_ff=jnp.ones((num_layers, 1, model_dim), jnp.float32),
        w1=w(ks[3], (num_layers, model_dim, dff)),
        b1=w(ks[4], (num_layers, 1, dff), 0.02),
        w2=w(ks[5], (num_layers, dff, model_dim)),
        b2=w(ks[6], (num_layers, 1, model_dim), 0.02),
        g_out=jnp.ones((1, model_dim), jnp.float32),
    )


if __name__ == "__main__":
    # Small config: model_dim=32, num_layers=2, attn_head_dim=16, attn_num_heads=2,
    # ff_mult=4, dropout=0.0 (inference), flash=False, rotary embeddings on.
    B, N, D = 2, 8, 32
    HEADS, DH, LAYERS, MULT = 2, 16, 2, 4

    key = jax.random.PRNGKey(0)
    kx, kp = jax.random.split(key)
    x = jax.random.normal(kx, (B, N, D), dtype=jnp.float32)
    params = init_params(kp, model_dim=D, num_layers=LAYERS,
                         head_dim=DH, num_heads=HEADS, ff_mult=MULT)

    y = transformer_encoder(x, params, num_heads=HEADS, head_dim=DH)
    jax.block_until_ready(y)
    assert y.shape == (B, N, D)
    assert bool(jnp.all(jnp.isfinite(y)))
    print("KERNEL_OK")
</pallas_src>

<mosaic_0001>
module attributes {stable_mosaic.version = 11 : i64} {
  func.func @_encoder_kernel(%arg0: i32, %arg1: i32, %arg2: memref<2x8x32xf32, #tpu.memory_space<vmem>>, %arg3: memref<8x8xf32, #tpu.memory_space<vmem>>, %arg4: memref<8x8xf32, #tpu.memory_space<vmem>>, %arg5: memref<1x1x32xf32, #tpu.memory_space<vmem>>, %arg6: memref<1x32x32xbf16, #tpu.memory_space<vmem>>, %arg7: memref<1x32x16xbf16, #tpu.memory_space<vmem>>, %arg8: memref<1x32x16xbf16, #tpu.memory_space<vmem>>, %arg9: memref<1x32x32xbf16, #tpu.memory_space<vmem>>, %arg10: memref<1x1x32xf32, #tpu.memory_space<vmem>>, %arg11: memref<1x32x128xbf16, #tpu.memory_space<vmem>>, %arg12: memref<1x1x128xf32, #tpu.memory_space<vmem>>, %arg13: memref<1x128x32xbf16, #tpu.memory_space<vmem>>, %arg14: memref<1x1x32xf32, #tpu.memory_space<vmem>>, %arg15: memref<1x32xf32, #tpu.memory_space<vmem>>, %arg16: memref<2x8x32xf32, #tpu.memory_space<vmem>>, %arg17: memref<2x8x32xf32, #tpu.memory_space<vmem>>, %arg18: memref<16x32xbf16, #tpu.memory_space<vmem>>) attributes {dimension_semantics = [#tpu.dimension_semantics<parallel>, #tpu.dimension_semantics<arbitrary>], iteration_bounds = array<i64: 1, 2>, scalar_prefetch = 0 : i64, scratch_operands = 2 : i64, tpu.core_type = #tpu.core_type<tc>, window_params = [{transform_indices = @transform_0, window_bounds = array<i64: 2, 8, 32>}, {pipeline_mode = #tpu.pipeline_mode<synchronous>, transform_indices = @transform_1, window_bounds = array<i64: 8, 8>}, {pipeline_mode = #tpu.pipeline_mode<synchronous>, transform_indices = @transform_2, window_bounds = array<i64: 8, 8>}, {transform_indices = @transform_3, window_bounds = array<i64: 1, 1, 32>}, {transform_indices = @transform_4, window_bounds = array<i64: 1, 32, 32>}, {transform_indices = @transform_5, window_bounds = array<i64: 1, 32, 16>}, {transform_indices = @transform_6, window_bounds = array<i64: 1, 32, 16>}, {transform_indices = @transform_7, window_bounds = array<i64: 1, 32, 32>}, {transform_indices = @transform_8, window_bounds = array<i64: 1, 1, 32>}, {transform_indices = @transform_9, window_bounds = array<i64: 1, 32, 128>}, {transform_indices = @transform_10, window_bounds = array<i64: 1, 1, 128>}, {transform_indices = @transform_11, window_bounds = array<i64: 1, 128, 32>}, {transform_indices = @transform_12, window_bounds = array<i64: 1, 1, 32>}, {pipeline_mode = #tpu.pipeline_mode<synchronous>, transform_indices = @transform_13, window_bounds = array<i64: 1, 32>}, {transform_indices = @transform_14, window_bounds = array<i64: 2, 8, 32>}]} {
    %c0_i32 = arith.constant 0 : i32
    %0 = arith.cmpi eq, %arg1, %c0_i32 : i32
    %1 = arith.extui %0 : i1 to i32
    %c0_i32_0 = arith.constant 0 : i32
    %2 = arith.cmpi ne, %1, %c0_i32_0 : i32
    scf.if %2 {
      %c0_90 = arith.constant 0 : index
      %c0_91 = arith.constant 0 : index
      %c0_92 = arith.constant 0 : index
      %245 = vector.load %arg2[%c0_90, %c0_91, %c0_92] : memref<2x8x32xf32, #tpu.memory_space<vmem>>, vector<2x8x32xf32>
      %c0_93 = arith.constant 0 : index
      %c0_94 = arith.constant 0 : index
      %c0_95 = arith.constant 0 : index
      %246 = vector.load %arg17[%c0_93, %c0_94, %c0_95] : memref<2x8x32xf32, #tpu.memory_space<vmem>>, vector<2x8x32xf32>
      tpu.vector_store %arg17[%c0_93, %c0_94, %c0_95], %245 {strides = array<i32>} : memref<2x8x32xf32, #tpu.memory_space<vmem>>, vector<2x8x32xf32>,
    } else {
    }
    %c0 = arith.constant 0 : index
    %c0_1 = arith.constant 0 : index
    %c0_2 = arith.constant 0 : index
    %3 = vector.load %arg17[%c0, %c0_1, %c0_2] : memref<2x8x32xf32, #tpu.memory_space<vmem>>, vector<2x8x32xf32>
    %4 = vector.shape_cast %3 : vector<2x8x32xf32> to vector<16x32xf32>
    %c0_3 = arith.constant 0 : index
    %c0_4 = arith.constant 0 : index
    %5 = vector.load %arg3[%c0_3, %c0_4] : memref<8x8xf32, #tpu.memory_space<vmem>>, vector<8x8xf32>
    %c0_5 = arith.constant 0 : index
    %c0_6 = arith.constant 0 : index
    %6 = vector.load %arg4[%c0_5, %c0_6] : memref<8x8xf32, #tpu.memory_space<vmem>>, vector<8x8xf32>
    %7 = tpu.concatenate %5, %5 in 1 : vector<8x8xf32>, vector<8x8xf32> -> vector<8x16xf32>
    %8 = tpu.concatenate %6, %6 in 1 : vector<8x8xf32>, vector<8x8xf32> -> vector<8x16xf32>
    %c0_7 = arith.constant 0 : index
    %c0_8 = arith.constant 0 : index
    %c0_9 = arith.constant 0 : index
    %9 = vector.load %arg5[%c0_7, %c0_8, %c0_9] : memref<1x1x32xf32, #tpu.memory_space<vmem>>, vector<1x1x32xf32>
    %10 = vector.shape_cast %9 : vector<1x1x32xf32> to vector<32xf32>
    %11 = arith.mulf %4, %4 : vector<16x32xf32>
    %cst = arith.constant dense<0.000000e+00> : vector<16xf32>
    %12 = vector.multi_reduction <add>, %11, %cst [1] : vector<16x32xf32> to vector<16xf32>
    %13 = vector.shape_cast %12 : vector<16xf32> to vector<16x1xf32>
    %cst_10 = arith.constant 1.000000e-24 : f32
    %14 = vector.broadcast %cst_10 : f32 to vector<16x1xf32>
    %15 = arith.maximumf %13, %14 : vector<16x1xf32>
    %16 = math.rsqrt %15 : vector<16x1xf32>
    %17 = vector.broadcast %16 : vector<16x1xf32> to vector<16x32xf32>
    %18 = arith.mulf %4, %17 : vector<16x32xf32>
    %19 = vector.shape_cast %10 : vector<32xf32> to vector<1x32xf32>
    %20 = vector.broadcast %19 : vector<1x32xf32> to vector<16x32xf32>
    %21 = arith.mulf %18, %20 : vector<16x32xf32>
    %22 = arith.truncf %21 : vector<16x32xf32> to vector<16x32xbf16>
    %c0_11 = arith.constant 0 : index
    %c0_12 = arith.constant 0 : index
    %c0_13 = arith.constant 0 : index
    %23 = vector.load %arg6[%c0_11, %c0_12, %c0_13] : memref<1x32x32xbf16, #tpu.memory_space<vmem>>, vector<1x32x32xbf16>
    %24 = vector.shape_cast %23 : vector<1x32x32xbf16> to vector<32x32xbf16>
    %cst_14 = arith.constant dense<0.000000e+00> : vector<16x32xf32>
    %25 = tpu.matmul %22, %24, %cst_14 {dimension_numbers = #tpu.dot_dimension_numbers<[1], [0], [0], [1], [0, 0, 1, 1], [], []>} : vector<16x32xbf16>, vector<32x32xbf16>, vector<16x32xf32> -> vector<16x32xf32>
    %c0_15 = arith.constant 0 : index
    %c0_16 = arith.constant 0 : index
    %c0_17 = arith.constant 0 : index
    %26 = vector.load %arg7[%c0_15, %c0_16, %c0_17] : memref<1x32x16xbf16, #tpu.memory_space<vmem>>, vector<1x32x16xbf16>
    %27 = vector.shape_cast %26 : vector<1x32x16xbf16> to vector<32x16xbf16>
    %cst_18 = arith.constant dense<0.000000e+00> : vector<16x16xf32>
    %28 = tpu.matmul %22, %27, %cst_18 {dimension_numbers = #tpu.dot_dimension_numbers<[1], [0], [0], [1], [0, 0, 1, 1], [], []>} : vector<16x32xbf16>, vector<32x16xbf16>, vector<16x16xf32> -> vector<16x16xf32>
    %c0_19 = arith.constant 0 : index
    %c0_20 = arith.constant 0 : index
    %c0_21 = arith.constant 0 : index
    %29 = vector.load %arg8[%c0_19, %c0_20, %c0_21] : memref<1x32x16xbf16, #tpu.memory_space<vmem>>, vector<1x32x16xbf16>
    %30 = vector.shape_cast %29 : vector<1x32x16xbf16> to vector<32x16xbf16>
    %cst_22 = arith.constant dense<0.000000e+00> : vector<16x16xf32>
    %31 = tpu.matmul %22, %30, %cst_22 {dimension_numbers = #tpu.dot_dimension_numbers<[1], [0], [0], [1], [0, 0, 1, 1], [], []>} : vector<16x32xbf16>, vector<32x16xbf16>, vector<16x16xf32> -> vector<16x16xf32>
    %32 = vector.shape_cast %25 : vector<16x32xf32> to vector<2x8x32xf32>
    %33 = vector.extract_strided_slice %32 {offsets = [0, 0, 0], sizes = [2, 8, 16], strides = [1, 1, 1]} : vector<2x8x32xf32> to vector<2x8x16xf32>
    %34 = vector.extract_strided_slice %32 {offsets = [0, 0, 16], sizes = [2, 8, 16], strides = [1, 1, 1]} : vector<2x8x32xf32> to vector<2x8x16xf32>
    %35 = vector.shape_cast %7 : vector<8x16xf32> to vector<1x8x16xf32>
    %36 = vector.broadcast %35 : vector<1x8x16xf32> to vector<2x8x16xf32>
    %37 = arith.mulf %33, %36 : vector<2x8x16xf32>
    %38 = vector.shape_cast %8 : vector<8x16xf32> to vector<1x8x16xf32>
    %39 = vector.broadcast %38 : vector<1x8x16xf32> to vector<2x8x16xf32>
    %40 = arith.mulf %34, %39 : vector<2x8x16xf32>
    %41 = arith.subf %37, %40 : vector<2x8x16xf32>
    %42 = vector.shape_cast %7 : vector<8x16xf32> to vector<1x8x16xf32>
    %43 = vector.broadcast %42 : vector<1x8x16xf32> to vector<2x8x16xf32>
    %44 = arith.mulf %34, %43 : vector<2x8x16xf32>
    %45 = vector.shape_cast %8 : vector<8x16xf32> to vector<1x8x16xf32>
    %46 = vector.broadcast %45 : vector<1x8x16xf32> to vector<2x8x16xf32>
    %47 = arith.mulf %33, %46 : vector<2x8x16xf32>
    %48 = arith.addf %44, %47 : vector<2x8x16xf32>
    %49 = vector.shape_cast %28 : vector<16x16xf32> to vector<2x8x16xf32>
    %50 = vector.extract_strided_slice %49 {offsets = [0, 0, 0], sizes = [2, 8, 8], strides = [1, 1, 1]} : vector<2x8x16xf32> to vector<2x8x8xf32>
    %51 = vector.extract_strided_slice %49 {offsets = [0, 0, 8], sizes = [2, 8, 8], strides = [1, 1, 1]} : vector<2x8x16xf32> to vector<2x8x8xf32>
    %52 = vector.shape_cast %5 : vector<8x8xf32> to vector<1x8x8xf32>
    %53 = vector.broadcast %52 : vector<1x8x8xf32> to vector<2x8x8xf32>
    %54 = arith.mulf %50, %53 : vector<2x8x8xf32>
    %55 = vector.shape_cast %6 : vector<8x8xf32> to vector<1x8x8xf32>
    %56 = vector.broadcast %55 : vector<1x8x8xf32> to vector<2x8x8xf32>
    %57 = arith.mulf %51, %56 : vector<2x8x8xf32>
    %58 = arith.subf %54, %57 : vector<2x8x8xf32>
    %59 = vector.shape_cast %5 : vector<8x8xf32> to vector<1x8x8xf32>
    %60 = vector.broadcast %59 : vector<1x8x8xf32> to vector<2x8x8xf32>
    %61 = arith.mulf %51, %60 : vector<2x8x8xf32>
    %62 = vector.shape_cast %6 : vector<8x8xf32> to vector<1x8x8xf32>
    %63 = vector.broadcast %62 : vector<1x8x8xf32> to vector<2x8x8xf32>
    %64 = arith.mulf %50, %63 : vector<2x8x8xf32>
    %65 = arith.addf %61, %64 : vector<2x8x8xf32>
    %66 = tpu.concatenate %58, %65 in 2 : vector<2x8x8xf32>, vector<2x8x8xf32> -> vector<2x8x16xf32>
    %67 = arith.truncf %66 : vector<2x8x16xf32> to vector<2x8x16xbf16>
    %68 = vector.shape_cast %31 : vector<16x16xf32> to vector<2x8x16xf32>
    %69 = arith.truncf %68 : vector<2x8x16xf32> to vector<2x8x16xbf16>
    %70 = vector.extract_strided_slice %67 {offsets = [0, 0, 0], sizes = [1, 8, 16], strides = [1, 1, 1]} : vector<2x8x16xbf16> to vector<1x8x16xbf16>
    %71 = vector.shape_cast %70 : vector<1x8x16xbf16> to vector<8x16xbf16>
    %72 = vector.extract_strided_slice %69 {offsets = [0, 0, 0], sizes = [1, 8, 16], strides = [1, 1, 1]} : vector<2x8x16xbf16> to vector<1x8x16xbf16>
    %73 = vector.shape_cast %72 : vector<1x8x16xbf16> to vector<8x16xbf16>
    %74 = vector.extract_strided_slice %41 {offsets = [0, 0, 0], sizes = [1, 8, 16], strides = [1, 1, 1]} : vector<2x8x16xf32> to vector<1x8x16xf32>
    %75 = vector.shape_cast %74 : vector<1x8x16xf32> to vector<8x16xf32>
    %76 = vector.extract_strided_slice %48 {offsets = [0, 0, 0], sizes = [1, 8, 16], strides = [1, 1, 1]} : vector<2x8x16xf32> to vector<1x8x16xf32>
    %77 = vector.shape_cast %76 : vector<1x8x16xf32> to vector<8x16xf32>
    %78 = vector.extract_strided_slice %75 {offsets = [0, 0], sizes = [8, 8], strides = [1, 1]} : vector<8x16xf32> to vector<8x8xf32>
    %79 = vector.extract_strided_slice %77 {offsets = [0, 0], sizes = [8, 8], strides = [1, 1]} : vector<8x16xf32> to vector<8x8xf32>
    %80 = tpu.concatenate %78, %79 in 1 : vector<8x8xf32>, vector<8x8xf32> -> vector<8x16xf32>
    %81 = arith.truncf %80 : vector<8x16xf32> to vector<8x16xbf16>
    %cst_23 = arith.constant dense<0.000000e+00> : vector<8x8xf32>
    %82 = tpu.matmul %81, %71, %cst_23 {dimension_numbers = #tpu.dot_dimension_numbers<[1], [1], [0], [0], [0, 0, 1, 0], [], []>} : vector<8x16xbf16>, vector<8x16xbf16>, vector<8x8xf32> -> vector<8x8xf32>
    %cst_24 = arith.constant dense<0xFF800000> : vector<8xf32>
    %83 = vector.multi_reduction <maximumf>, %82, %cst_24 [1] : vector<8x8xf32> to vector<8xf32>
    %84 = vector.shape_cast %83 : vector<8xf32> to vector<8x1xf32>
    %85 = vector.broadcast %84 : vector<8x1xf32> to vector<8x8xf32>
    %86 = arith.subf %82, %85 : vector<8x8xf32>
    %87 = math.exp %86 : vector<8x8xf32>
    %cst_25 = arith.constant dense<0.000000e+00> : vector<8xf32>
    %88 = vector.multi_reduction <add>, %87, %cst_25 [1] : vector<8x8xf32> to vector<8xf32>
    %89 = vector.shape_cast %88 : vector<8xf32> to vector<8x1xf32>
    %90 = tpu.reciprocal %89 {approx = true} : vector<8x1xf32> -> vector<8x1xf32>
    %91 = vector.broadcast %90 : vector<8x1xf32> to vector<8x8xf32>
    %92 = arith.mulf %87, %91 : vector<8x8xf32>
    %93 = arith.truncf %92 : vector<8x8xf32> to vector<8x8xbf16>
    %cst_26 = arith.constant dense<0.000000e+00> : vector<8x16xf32>
    %94 = tpu.matmul %93, %73, %cst_26 {dimension_numbers = #tpu.dot_dimension_numbers<[1], [0], [0], [1], [0, 0, 1, 1], [], []>} : vector<8x8xbf16>, vector<8x16xbf16>, vector<8x16xf32> -> vector<8x16xf32>
    %95 = arith.truncf %94 : vector<8x16xf32> to vector<8x16xbf16>
    %c0_27 = arith.constant 0 : index
    %c0_28 = arith.constant 0 : index
    %96 = vector.load %arg18[%c0_27, %c0_28] : memref<16x32xbf16, #tpu.memory_space<vmem>>, vector<8x16xbf16>
    tpu.vector_store %arg18[%c0_27, %c0_28], %95 {strides = array<i32>} : memref<16x32xbf16, #tpu.memory_space<vmem>>, vector<8x16xbf16>,
    %97 = vector.extract_strided_slice %75 {offsets = [0, 8], sizes = [8, 8], strides = [1, 1]} : vector<8x16xf32> to vector<8x8xf32>
    %98 = vector.extract_strided_slice %77 {offsets = [0, 8], sizes = [8, 8], strides = [1, 1]} : vector<8x16xf32> to vector<8x8xf32>
    %99 = tpu.concatenate %97, %98 in 1 : vector<8x8xf32>, vector<8x8xf32> -> vector<8x16xf32>
    %100 = arith.truncf %99 : vector<8x16xf32> to vector<8x16xbf16>
    %cst_29 = arith.constant dense<0.000000e+00> : vector<8x8xf32>
    %101 = tpu.matmul %100, %71, %cst_29 {dimension_numbers = #tpu.dot_dimension_numbers<[1], [1], [0], [0], [0, 0, 1, 0], [], []>} : vector<8x16xbf16>, vector<8x16xbf16>, vector<8x8xf32> -> vector<8x8xf32>
    %cst_30 = arith.constant dense<0xFF800000> : vector<8xf32>
    %102 = vector.multi_reduction <maximumf>, %101, %cst_30 [1] : vector<8x8xf32> to vector<8xf32>
    %103 = vector.shape_cast %102 : vector<8xf32> to vector<8x1xf32>
    %104 = vector.broadcast %103 : vector<8x1xf32> to vector<8x8xf32>
    %105 = arith.subf %101, %104 : vector<8x8xf32>
    %106 = math.exp %105 : vector<8x8xf32>
    %cst_31 = arith.constant dense<0.000000e+00> : vector<8xf32>
    %107 = vector.multi_reduction <add>, %106, %cst_31 [1] : vector<8x8xf32> to vector<8xf32>
    %108 = vector.shape_cast %107 : vector<8xf32> to vector<8x1xf32>
    %109 = tpu.reciprocal %108 {approx = true} : vector<8x1xf32> -> vector<8x1xf32>
    %110 = vector.broadcast %109 : vector<8x1xf32> to vector<8x8xf32>
    %111 = arith.mulf %106, %110 : vector<8x8xf32>
    %112 = arith.truncf %111 : vector<8x8xf32> to vector<8x8xbf16>
    %cst_32 = arith.constant dense<0.000000e+00> : vector<8x16xf32>
    %113 = tpu.matmul %112, %73, %cst_32 {dimension_numbers = #tpu.dot_dimension_numbers<[1], [0], [0], [1], [0, 0, 1, 1], [], []>} : vector<8x8xbf16>, vector<8x16xbf16>, vector<8x16xf32> -> vector<8x16xf32>
    %114 = arith.truncf %113 : vector<8x16xf32> to vector<8x16xbf16>
    %c0_33 = arith.constant 0 : index
    %c16 = arith.constant 16 : index
    %115 = vector.load %arg18[%c0_33, %c16] : memref<16x32xbf16, #tpu.memory_space<vmem>>, vector<8x16xbf16>
    tpu.vector_store %arg18[%c0_33, %c16], %114 {strides = array<i32>} : memref<16x32xbf16, #tpu.memory_space<vmem>>, vector<8x16xbf16>,
    %116 = vector.extract_strided_slice %67 {offsets = [1, 0, 0], sizes = [1, 8, 16], strides = [1, 1, 1]} : vector<2x8x16xbf16> to vector<1x8x16xbf16>
    %117 = vector.shape_cast %116 : vector<1x8x16xbf16> to vector<8x16xbf16>
    %118 = vector.extract_strided_slice %69 {offsets = [1, 0, 0], sizes = [1, 8, 16], strides = [1, 1, 1]} : vector<2x8x16xbf16> to vector<1x8x16xbf16>
    %119 = vector.shape_cast %118 : vector<1x8x16xbf16> to vector<8x16xbf16>
    %120 = vector.extract_strided_slice %41 {offsets = [1, 0, 0], sizes = [1, 8, 16], strides = [1, 1, 1]} : vector<2x8x16xf32> to vector<1x8x16xf32>
    %121 = vector.shape_cast %120 : vector<1x8x16xf32> to vector<8x16xf32>
    %122 = vector.extract_strided_slice %48 {offsets = [1, 0, 0], sizes = [1, 8, 16], strides = [1, 1, 1]} : vector<2x8x16xf32> to vector<1x8x16xf32>
    %123 = vector.shape_cast %122 : vector<1x8x16xf32> to vector<8x16xf32>
    %124 = vector.extract_strided_slice %121 {offsets = [0, 0], sizes = [8, 8], strides = [1, 1]} : vector<8x16xf32> to vector<8x8xf32>
    %125 = vector.extract_strided_slice %123 {offsets = [0, 0], sizes = [8, 8], strides = [1, 1]} : vector<8x16xf32> to vector<8x8xf32>
    %126 = tpu.concatenate %124, %125 in 1 : vector<8x8xf32>, vector<8x8xf32> -> vector<8x16xf32>
    %127 = arith.truncf %126 : vector<8x16xf32> to vector<8x16xbf16>
    %cst_34 = arith.constant dense<0.000000e+00> : vector<8x8xf32>
    %128 = tpu.matmul %127, %117, %cst_34 {dimension_numbers = #tpu.dot_dimension_numbers<[1], [1], [0], [0], [0, 0, 1, 0], [], []>} : vector<8x16xbf16>, vector<8x16xbf16>, vector<8x8xf32> -> vector<8x8xf32>
    %cst_35 = arith.constant dense<0xFF800000> : vector<8xf32>
    %129 = vector.multi_reduction <maximumf>, %128, %cst_35 [1] : vector<8x8xf32> to vector<8xf32>
    %130 = vector.shape_cast %129 : vector<8xf32> to vector<8x1xf32>
    %131 = vector.broadcast %130 : vector<8x1xf32> to vector<8x8xf32>
    %132 = arith.subf %128, %131 : vector<8x8xf32>
    %133 = math.exp %132 : vector<8x8xf32>
    %cst_36 = arith.constant dense<0.000000e+00> : vector<8xf32>
    %134 = vector.multi_reduction <add>, %133, %cst_36 [1] : vector<8x8xf32> to vector<8xf32>
    %135 = vector.shape_cast %134 : vector<8xf32> to vector<8x1xf32>
    %136 = tpu.reciprocal %135 {approx = true} : vector<8x1xf32> -> vector<8x1xf32>
    %137 = vector.broadcast %136 : vector<8x1xf32> to vector<8x8xf32>
    %138 = arith.mulf %133, %137 : vector<8x8xf32>
    %139 = arith.truncf %138 : vector<8x8xf32> to vector<8x8xbf16>
    %cst_37 = arith.constant dense<0.000000e+00> : vector<8x16xf32>
    %140 = tpu.matmul %139, %119, %cst_37 {dimension_numbers = #tpu.dot_dimension_numbers<[1], [0], [0], [1], [0, 0, 1, 1], [], []>} : vector<8x8xbf16>, vector<8x16xbf16>, vector<8x16xf32> -> vector<8x16xf32>
    %141 = arith.truncf %140 : vector<8x16xf32> to vector<8x16xbf16>
    %c8 = arith.constant 8 : index
    %c0_38 = arith.constant 0 : index
    %142 = vector.load %arg18[%c8, %c0_38] : memref<16x32xbf16, #tpu.memory_space<vmem>>, vector<8x16xbf16>
    tpu.vector_store %arg18[%c8, %c0_38], %141 {strides = array<i32>} : memref<16x32xbf16, #tpu.memory_space<vmem>>, vector<8x16xbf16>,
    %143 = vector.extract_strided_slice %121 {offsets = [0, 8], sizes = [8, 8], strides = [1, 1]} : vector<8x16xf32> to vector<8x8xf32>
    %144 = vector.extract_strided_slice %123 {offsets = [0, 8], sizes = [8, 8], strides = [1, 1]} : vector<8x16xf32> to vector<8x8xf32>
    %145 = tpu.concatenate %143, %144 in 1 : vector<8x8xf32>, vector<8x8xf32> -> vector<8x16xf32>
    %146 = arith.truncf %145 : vector<8x16xf32> to vector<8x16xbf16>
    %cst_39 = arith.constant dense<0.000000e+00> : vector<8x8xf32>
    %147 = tpu.matmul %146, %117, %cst_39 {dimension_numbers = #tpu.dot_dimension_numbers<[1], [1], [0], [0], [0, 0, 1, 0], [], []>} : vector<8x16xbf16>, vector<8x16xbf16>, vector<8x8xf32> -> vector<8x8xf32>
    %cst_40 = arith.constant dense<0xFF800000> : vector<8xf32>
    %148 = vector.multi_reduction <maximumf>, %147, %cst_40 [1] : vector<8x8xf32> to vector<8xf32>
    %149 = vector.shape_cast %148 : vector<8xf32> to vector<8x1xf32>
    %150 = vector.broadcast %149 : vector<8x1xf32> to vector<8x8xf32>
    %151 = arith.subf %147, %150 : vector<8x8xf32>
    %152 = math.exp %151 : vector<8x8xf32>
    %cst_41 = arith.constant dense<0.000000e+00> : vector<8xf32>
    %153 = vector.multi_reduction <add>, %152, %cst_41 [1] : vector<8x8xf32> to vector<8xf32>
    %154 = vector.shape_cast %153 : vector<8xf32> to vector<8x1xf32>
    %155 = tpu.reciprocal %154 {approx = true} : vector<8x1xf32> -> vector<8x1xf32>
    %156 = vector.broadcast %155 : vector<8x1xf32> to vector<8x8xf32>
    %157 = arith.mulf %152, %156 : vector<8x8xf32>
    %158 = arith.truncf %157 : vector<8x8xf32> to vector<8x8xbf16>
    %cst_42 = arith.constant dense<0.000000e+00> : vector<8x16xf32>
    %159 = tpu.matmul %158, %119, %cst_42 {dimension_numbers = #tpu.dot_dimension_numbers<[1], [0], [0], [1], [0, 0, 1, 1], [], []>} : vector<8x8xbf16>, vector<8x16xbf16>, vector<8x16xf32> -> vector<8x16xf32>
    %160 = arith.truncf %159 : vector<8x16xf32> to vector<8x16xbf16>
    %c8_43 = arith.constant 8 : index
    %c16_44 = arith.constant 16 : index
    %161 = vector.load %arg18[%c8_43, %c16_44] : memref<16x32xbf16, #tpu.memory_space<vmem>>, vector<8x16xbf16>
    tpu.vector_store %arg18[%c8_43, %c16_44], %160 {strides = array<i32>} : memref<16x32xbf16, #tpu.memory_space<vmem>>, vector<8x16xbf16>,
    %c0_45 = arith.constant 0 : index
    %c0_46 = arith.constant 0 : index
    %162 = vector.load %arg18[%c0_45, %c0_46] : memref<16x32xbf16, #tpu.memory_space<vmem>>, vector<16x32xbf16>
    %c0_47 = arith.constant 0 : index
    %c0_48 = arith.constant 0 : index
    %c0_49 = arith.constant 0 : index
    %163 = vector.load %arg9[%c0_47, %c0_48, %c0_49] : memref<1x32x32xbf16, #tpu.memory_space<vmem>>, vector<1x32x32xbf16>
    %164 = vector.shape_cast %163 : vector<1x32x32xbf16> to vector<32x32xbf16>
    %cst_50 = arith.constant dense<0.000000e+00> : vector<16x32xf32>
    %165 = tpu.matmul %162, %164, %cst_50 {dimension_numbers = #tpu.dot_dimension_numbers<[1], [0], [0], [1], [0, 0, 1, 1], [], []>} : vector<16x32xbf16>, vector<32x32xbf16>, vector<16x32xf32> -> vector<16x32xf32>
    %166 = arith.addf %4, %165 : vector<16x32xf32>
    %c0_51 = arith.constant 0 : index
    %c0_52 = arith.constant 0 : index
    %c0_53 = arith.constant 0 : index
    %167 = vector.load %arg10[%c0_51, %c0_52, %c0_53] : memref<1x1x32xf32, #tpu.memory_space<vmem>>, vector<1x1x32xf32>
    %168 = vector.shape_cast %167 : vector<1x1x32xf32> to vector<32xf32>
    %169 = arith.mulf %166, %166 : vector<16x32xf32>
    %cst_54 = arith.constant dense<0.000000e+00> : vector<16xf32>
    %170 = vector.multi_reduction <add>, %169, %cst_54 [1] : vector<16x32xf32> to vector<16xf32>
    %171 = vector.shape_cast %170 : vector<16xf32> to vector<16x1xf32>
    %cst_55 = arith.constant 1.000000e-24 : f32
    %172 = vector.broadcast %cst_55 : f32 to vector<16x1xf32>
    %173 = arith.maximumf %171, %172 : vector<16x1xf32>
    %174 = math.rsqrt %173 : vector<16x1xf32>
    %175 = vector.broadcast %174 : vector<16x1xf32> to vector<16x32xf32>
    %176 = arith.mulf %166, %175 : vector<16x32xf32>
    %177 = vector.shape_cast %168 : vector<32xf32> to vector<1x32xf32>
    %178 = vector.broadcast %177 : vector<1x32xf32> to vector<16x32xf32>
    %179 = arith.mulf %176, %178 : vector<16x32xf32>
    %180 = arith.truncf %179 : vector<16x32xf32> to vector<16x32xbf16>
    %c0_56 = arith.constant 0 : index
    %c0_57 = arith.constant 0 : index
    %c0_58 = arith.constant 0 : index
    %181 = vector.load %arg11[%c0_56, %c0_57, %c0_58] : memref<1x32x128xbf16, #tpu.memory_space<vmem>>, vector<1x32x128xbf16>
    %182 = vector.shape_cast %181 : vector<1x32x128xbf16> to vector<32x128xbf16>
    %cst_59 = arith.constant dense<0.000000e+00> : vector<16x128xf32>
    %183 = tpu.matmul %180, %182, %cst_59 {dimension_numbers = #tpu.dot_dimension_numbers<[1], [0], [0], [1], [0, 0, 1, 1], [], []>} : vector<16x32xbf16>, vector<32x128xbf16>, vector<16x128xf32> -> vector<16x128xf32>
    %c0_60 = arith.constant 0 : index
    %c0_61 = arith.constant 0 : index
    %c0_62 = arith.constant 0 : index
    %184 = vector.load %arg12[%c0_60, %c0_61, %c0_62] : memref<1x1x128xf32, #tpu.memory_space<vmem>>, vector<1x1x128xf32>
    %185 = vector.shape_cast %184 : vector<1x1x128xf32> to vector<128xf32>
    %186 = vector.shape_cast %185 : vector<128xf32> to vector<1x128xf32>
    %187 = vector.broadcast %186 : vector<1x128xf32> to vector<16x128xf32>
    %188 = arith.addf %183, %187 : vector<16x128xf32>
    %cst_63 = arith.constant 5.000000e-01 : f32
    %189 = vector.broadcast %cst_63 : f32 to vector<16x128xf32>
    %190 = arith.mulf %189, %188 : vector<16x128xf32>
    %cst_64 = arith.constant 0.707106769 : f32
    %191 = vector.broadcast %cst_64 : f32 to vector<16x128xf32>
    %192 = arith.mulf %188, %191 : vector<16x128xf32>
    %cst_65 = arith.constant 0.000000e+00 : f32
    %193 = vector.broadcast %cst_65 : f32 to vector<16x128xf32>
    %194 = arith.cmpf oge, %192, %193 : vector<16x128xf32>
    %cst_66 = arith.constant 1.000000e+00 : f32
    %cst_67 = arith.constant -1.000000e+00 : f32
    %195 = vector.broadcast %cst_66 : f32 to vector<16x128xf32>
    %196 = vector.broadcast %cst_67 : f32 to vector<16x128xf32>
    %197 = arith.select %194, %195, %196 : vector<16x128xi1>, vector<16x128xf32>
    %198 = math.absf %192 : vector<16x128xf32>
    %cst_68 = arith.constant 0.327591091 : f32
    %199 = vector.broadcast %cst_68 : f32 to vector<16x128xf32>
    %200 = arith.mulf %199, %198 : vector<16x128xf32>
    %cst_69 = arith.constant 1.000000e+00 : f32
    %201 = vector.broadcast %cst_69 : f32 to vector<16x128xf32>
    %202 = arith.addf %201, %200 : vector<16x128xf32>
    %cst_70 = arith.constant 1.000000e+00 : f32
    %203 = vector.broadcast %cst_70 : f32 to vector<16x128xf32>
    %204 = arith.divf %203, %202 : vector<16x128xf32>
    %cst_71 = arith.constant 1.06140542 : f32
    %205 = vector.broadcast %cst_71 : f32 to vector<16x128xf32>
    %206 = arith.mulf %205, %204 : vector<16x128xf32>
    %cst_72 = arith.constant -1.45315206 : f32
    %207 = vector.broadcast %cst_72 : f32 to vector<16x128xf32>
    %208 = arith.addf %206, %207 : vector<16x128xf32>
    %209 = arith.mulf %208, %204 : vector<16x128xf32>
    %cst_73 = arith.constant 1.42141378 : f32
    %210 = vector.broadcast %cst_73 : f32 to vector<16x128xf32>
    %211 = arith.addf %209, %210 : vector<16x128xf32>
    %212 = arith.mulf %211, %204 : vector<16x128xf32>
    %cst_74 = arith.constant -0.284496725 : f32
    %213 = vector.broadcast %cst_74 : f32 to vector<16x128xf32>
    %214 = arith.addf %212, %213 : vector<16x128xf32>
    %215 = arith.mulf %214, %204 : vector<16x128xf32>
    %cst_75 = arith.constant 0.254829586 : f32
    %216 = vector.broadcast %cst_75 : f32 to vector<16x128xf32>
    %217 = arith.addf %215, %216 : vector<16x128xf32>
    %218 = arith.mulf %217, %204 : vector<16x128xf32>
    %cst_76 = arith.constant 0.000000e+00 : f32
    %219 = vector.broadcast %cst_76 : f32 to vector<16x128xf32>
    %220 = arith.subf %219, %198 : vector<16x128xf32>
    %221 = arith.mulf %220, %198 : vector<16x128xf32>
    %222 = math.exp %221 : vector<16x128xf32>
    %223 = arith.mulf %218, %222 : vector<16x128xf32>
    %cst_77 = arith.constant 1.000000e+00 : f32
    %224 = vector.broadcast %cst_77 : f32 to vector<16x128xf32>
    %225 = arith.subf %224, %223 : vector<16x128xf32>
    %226 = arith.mulf %197, %225 : vector<16x128xf32>
    %cst_78 = arith.constant 1.000000e+00 : f32
    %227 = vector.broadcast %cst_78 : f32 to vector<16x128xf32>
    %228 = arith.addf %227, %226 : vector<16x128xf32>
    %229 = arith.mulf %190, %228 : vector<16x128xf32>
    %230 = arith.truncf %229 : vector<16x128xf32> to vector<16x128xbf16>
    %c0_79 = arith.constant 0 : index
    %c0_80 = arith.constant 0 : index
    %c0_81 = arith.constant 0 : index
    %231 = vector.load %arg13[%c0_79, %c0_80, %c0_81] : memref<1x128x32xbf16, #tpu.memory_space<vmem>>, vector<1x128x32xbf16>
    %232 = vector.shape_cast %231 : vector<1x128x32xbf16> to vector<128x32xbf16>
    %cst_82 = arith.constant dense<0.000000e+00> : vector<16x32xf32>
    %233 = tpu.matmul %230, %232, %cst_82 {dimension_numbers = #tpu.dot_dimension_numbers<[1], [0], [0], [1], [0, 0, 1, 1], [], []>} : vector<16x128xbf16>, vector<128x32xbf16>, vector<16x32xf32> -> vector<16x32xf32>
    %c0_83 = arith.constant 0 : index
    %c0_84 = arith.constant 0 : index
    %c0_85 = arith.constant 0 : index
    %234 = vector.load %arg14[%c0_83, %c0_84, %c0_85] : memref<1x1x32xf32, #tpu.memory_space<vmem>>, vector<1x1x32xf32>
    %235 = vector.shape_cast %234 : vector<1x1x32xf32> to vector<32xf32>
    %236 = vector.shape_cast %235 : vector<32xf32> to vector<1x32xf32>
    %237 = vector.broadcast %236 : vector<1x32xf32> to vector<16x32xf32>
    %238 = arith.addf %233, %237 : vector<16x32xf32>
    %239 = arith.addf %166, %238 : vector<16x32xf32>
    %240 = vector.shape_cast %239 : vector<16x32xf32> to vector<2x8x32xf32>
    %c0_86 = arith.constant 0 : index
    %c0_87 = arith.constant 0 : index
    %c0_88 = arith.constant 0 : index
    %241 = vector.load %arg17[%c0_86, %c0_87, %c0_88] : memref<2x8x32xf32, #tpu.memory_space<vmem>>, vector<2x8x32xf32>
    tpu.vector_store %arg17[%c0_86, %c0_87, %c0_88], %240 {strides = array<i32>} : memref<2x8x32xf32, #tpu.memory_space<vmem>>, vector<2x8x32xf32>,
    %c1_i32 = arith.constant 1 : i32
    %242 = arith.cmpi eq, %arg1, %c1_i32 : i32
    %243 = arith.extui %242 : i1 to i32
    %c0_i32_89 = arith.constant 0 : i32
    %244 = arith.cmpi ne, %243, %c0_i32_89 : i32
    scf.if %244 {
      %c0_90 = arith.constant 0 : index
      %c0_91 = arith.constant 0 : index
      %245 = vector.load %arg15[%c0_90, %c0_91] : memref<1x32xf32, #tpu.memory_space<vmem>>, vector<1x32xf32>
      %246 = vector.shape_cast %245 : vector<1x32xf32> to vector<32xf32>
      %247 = arith.mulf %239, %239 : vector<16x32xf32>
      %cst_92 = arith.constant dense<0.000000e+00> : vector<16xf32>
      %248 = vector.multi_reduction <add>, %247, %cst_92 [1] : vector<16x32xf32> to vector<16xf32>
      %249 = vector.shape_cast %248 : vector<16xf32> to vector<16x1xf32>
      %cst_93 = arith.constant 1.000000e-24 : f32
      %250 = vector.broadcast %cst_93 : f32 to vector<16x1xf32>
      %251 = arith.maximumf %249, %250 : vector<16x1xf32>
      %252 = math.rsqrt %251 : vector<16x1xf32>
      %253 = vector.broadcast %252 : vector<16x1xf32> to vector<16x32xf32>
      %254 = arith.mulf %239, %253 : vector<16x32xf32>
      %255 = vector.shape_cast %246 : vector<32xf32> to vector<1x32xf32>
      %256 = vector.broadcast %255 : vector<1x32xf32> to vector<16x32xf32>
      %257 = arith.mulf %254, %256 : vector<16x32xf32>
      %258 = vector.shape_cast %257 : vector<16x32xf32> to vector<2x8x32xf32>
      %c0_94 = arith.constant 0 : index
      %c0_95 = arith.constant 0 : index
      %c0_96 = arith.constant 0 : index
      %259 = vector.load %arg16[%c0_94, %c0_95, %c0_96] : memref<2x8x32xf32, #tpu.memory_space<vmem>>, vector<2x8x32xf32>
      tpu.vector_store %arg16[%c0_94, %c0_95, %c0_96], %258 {strides = array<i32>} : memref<2x8x32xf32, #tpu.memory_space<vmem>>, vector<2x8x32xf32>,
    } else {
    }
    return
  }
  func.func @transform_0(%arg0: i32, %arg1: i32) -> (i32, i32, i32) {
    %c0_i32 = arith.constant 0 : i32
    %c0_i32_0 = arith.constant 0 : i32
    %c0_i32_1 = arith.constant 0 : i32
    return %arg0, %c0_i32, %c0_i32_0 : i32, i32, i32
  }
  func.func @transform_1(%arg0: i32, %arg1: i32) -> (i32, i32) {
    %c0_i32 = arith.constant 0 : i32
    %c0_i32_0 = arith.constant 0 : i32
    %c0_i32_1 = arith.constant 0 : i32
    return %c0_i32, %c0_i32_0 : i32, i32
  }
  func.func @transform_2(%arg0: i32, %arg1: i32) -> (i32, i32) {
    %c0_i32 = arith.constant 0 : i32
    %c0_i32_0 = arith.constant 0 : i32
    %c0_i32_1 = arith.constant 0 : i32
    return %c0_i32, %c0_i32_0 : i32, i32
  }
  func.func @transform_3(%arg0: i32, %arg1: i32) -> (i32, i32, i32) {
    %c0_i32 = arith.constant 0 : i32
    %c0_i32_0 = arith.constant 0 : i32
    %c0_i32_1 = arith.constant 0 : i32
    return %arg1, %c0_i32, %c0_i32_0 : i32, i32, i32
  }
  func.func @transform_4(%arg0: i32, %arg1: i32) -> (i32, i32, i32) {
    %c0_i32 = arith.constant 0 : i32
    %c0_i32_0 = arith.constant 0 : i32
    %c0_i32_1 = arith.constant 0 : i32
    return %arg1, %c0_i32, %c0_i32_0 : i32, i32, i32
  }
  func.func @transform_5(%arg0: i32, %arg1: i32) -> (i32, i32, i32) {
    %c0_i32 = arith.constant 0 : i32
    %c0_i32_0 = arith.constant 0 : i32
    %c0_i32_1 = arith.constant 0 : i32
    return %arg1, %c0_i32, %c0_i32_0 : i32, i32, i32
  }
  func.func @transform_6(%arg0: i32, %arg1: i32) -> (i32, i32, i32) {
    %c0_i32 = arith.constant 0 : i32
    %c0_i32_0 = arith.constant 0 : i32
    %c0_i32_1 = arith.constant 0 : i32
    return %arg1, %c0_i32, %c0_i32_0 : i32, i32, i32
  }
  func.func @transform_7(%arg0: i32, %arg1: i32) -> (i32, i32, i32) {
    %c0_i32 = arith.constant 0 : i32
    %c0_i32_0 = arith.constant 0 : i32
    %c0_i32_1 = arith.constant 0 : i32
    return %arg1, %c0_i32, %c0_i32_0 : i32, i32, i32
  }
  func.func @transform_8(%arg0: i32, %arg1: i32) -> (i32, i32, i32) {
    %c0_i32 = arith.constant 0 : i32
    %c0_i32_0 = arith.constant 0 : i32
    %c0_i32_1 = arith.constant 0 : i32
    return %arg1, %c0_i32, %c0_i32_0 : i32, i32, i32
  }
  func.func @transform_9(%arg0: i32, %arg1: i32) -> (i32, i32, i32) {
    %c0_i32 = arith.constant 0 : i32
    %c0_i32_0 = arith.constant 0 : i32
    %c0_i32_1 = arith.constant 0 : i32
    return %arg1, %c0_i32, %c0_i32_0 : i32, i32, i32
  }
  func.func @transform_10(%arg0: i32, %arg1: i32) -> (i32, i32, i32) {
    %c0_i32 = arith.constant 0 : i32
    %c0_i32_0 = arith.constant 0 : i32
    %c0_i32_1 = arith.constant 0 : i32
    return %arg1, %c0_i32, %c0_i32_0 : i32, i32, i32
  }
  func.func @transform_11(%arg0: i32, %arg1: i32) -> (i32, i32, i32) {
    %c0_i32 = arith.constant 0 : i32
    %c0_i32_0 = arith.constant 0 : i32
    %c0_i32_1 = arith.constant 0 : i32
    return %arg1, %c0_i32, %c0_i32_0 : i32, i32, i32
  }
  func.func @transform_12(%arg0: i32, %arg1: i32) -> (i32, i32, i32) {
    %c0_i32 = arith.constant 0 : i32
    %c0_i32_0 = arith.constant 0 : i32
    %c0_i32_1 = arith.constant 0 : i32
    return %arg1, %c0_i32, %c0_i32_0 : i32, i32, i32
  }
  func.func @transform_13(%arg0: i32, %arg1: i32) -> (i32, i32) {
    %c0_i32 = arith.constant 0 : i32
    %c0_i32_0 = arith.constant 0 : i32
    %c0_i32_1 = arith.constant 0 : i32
    return %c0_i32, %c0_i32_0 : i32, i32
  }
  func.func @transform_14(%arg0: i32, %arg1: i32) -> (i32, i32, i32) {
    %c0_i32 = arith.constant 0 : i32
    %c0_i32_0 = arith.constant 0 : i32
    %c0_i32_1 = arith.constant 0 : i32
    return %arg0, %c0_i32, %c0_i32_0 : i32, i32, i32
  }
}

</mosaic_0001>

<llo_original>
// kernel: tpu_custom_call.1
$region0: #{tpu_custom_call.1}
  #allocation0 [shape = 'u32[]', space=smem, size = 0x4, offset = 0x4, fixed_abs, tag = 'smem constant byte address 0x4 - core index']
  #allocation1 [shape = 'u32[144,128]{1,0:T(1,128)}', space=vmem, size = 0x12000, scoped, tag = 'internal scratch']
  #allocation2 [shape = 'f32[2,8,32]{2,1,0:T(8,128)}', space=vmem, size = 0x2000, scoped, tag = 'scratch operand']
  #allocation3 [shape = 'bf16[16,32]{1,0:T(16,128)(2,1)}', space=vmem, size = 0x1000, scoped, tag = 'scratch operand']
  %s0 = inlined_call_operand.hbm [shape: f32[2,8,32], index: 0, kind: input, shape index: {}, may-alias: {0,14}]
  %s1 = inlined_call_operand.vmem [shape: f32[8,8], index: 1, kind: input, shape index: {}]
  %s2 = inlined_call_operand.vmem [shape: f32[8,8], index: 2, kind: input, shape index: {}]
  %s3 = inlined_call_operand.vmem [shape: f32[2,1,32], index: 3, kind: input, shape index: {}]
  %s4 = inlined_call_operand.vmem [shape: bf16[2,32,32], index: 4, kind: input, shape index: {}]
  %s5 = inlined_call_operand.vmem [shape: bf16[2,32,16], index: 5, kind: input, shape index: {}]
  %s6 = inlined_call_operand.vmem [shape: bf16[2,32,16], index: 6, kind: input, shape index: {}]
  %s7 = inlined_call_operand.vmem [shape: bf16[2,32,32], index: 7, kind: input, shape index: {}]
  %s8 = inlined_call_operand.vmem [shape: f32[2,1,32], index: 8, kind: input, shape index: {}]
  %s9 = inlined_call_operand.vmem [shape: bf16[2,32,128], index: 9, kind: input, shape index: {}]
  %s10 = inlined_call_operand.vmem [shape: f32[2,1,128], index: 10, kind: input, shape index: {}]
  %s11 = inlined_call_operand.vmem [shape: bf16[2,128,32], index: 11, kind: input, shape index: {}]
  %s12 = inlined_call_operand.vmem [shape: f32[2,1,32], index: 12, kind: input, shape index: {}]
  %s13 = inlined_call_operand.vmem [shape: f32[1,32], index: 13, kind: input, shape index: {}]
  %s14 = inlined_call_operand.hbm [shape: f32[2,8,32], index: 14, kind: output, shape index: {}, may-alias: {0,14}]
  %s15 = sld [smem:[#allocation0]]
  $region101: #{tpu_custom_call.1} parent=0
    _
  %s17 = ssub.s32 1, %s15
  %s18 = scalar_select 0, %s17, %s15
  $region1: #{tpu_custom_call.1} parent=0
    #allocation4 [shape = 'u8[8192]{0}', space=vmem, size = 0x2000, scoped, tag = 'input window, operand 0, single buffered']
    #allocation5 [shape = 's32[2]{0}', space=sflag, size = 0x8, scoped, tag = 'scoped memory for tpu_custom_call.1']
    #allocation6 [shape = 's32[2]{0}', space=sflag, size = 0x8, scoped, tag = 'scoped memory for tpu_custom_call.1']
    #allocation7 [shape = 'u8[8192]{0}', space=vmem, size = 0x2000, scoped, tag = 'output window, operand 0, single buffered']
    %19 = vsyncpa [#allocation5], 0
    %20 = vsyncpa [#allocation6], 0
    loop: start=0, step=1, limit=4
    $region2: #{tpu_custom_call.1} parent=1 // loop_pre_header
      _
    $region3: #{tpu_custom_call.1} parent=1 // loop_header
      %s22 = sphi 0, %s26
      %p23 = scmp.ge.s32.totalorder %s22, 4
      %s29 = sphi 0, %s41
      %s30 = sphi 0, %s37
      %s31 = sphi 0, %s29
      %s32 = sphi 0, %s30
      %s33 = sphi 0, %s31
      %s34 = sphi 0, %s32
      %s44 = sphi 0, %s46
      %s47 = sphi 0, %s44
      %s48 = sphi 0, %s47
      %s64 = sphi 0, %s48
      %s68 = sphi 0, %s68
      %s70 = sphi 0, %s68
      %s71 = sphi 0, %s70
      %s85 = sphi 0, %s71
      %s89 = sphi 0, %s89
      %s91 = sphi 0, %s89
      %s92 = sphi 0, %s91
      %s106 = sphi 0, %s92
      %s112 = sphi 0, %s114
      %s115 = sphi 0, %s112
      %s116 = sphi 0, %s115
      %s132 = sphi 0, %s116
      %s138 = sphi 0, %s140
      %s141 = sphi 0, %s138
      %s142 = sphi 0, %s141
      %s158 = sphi 0, %s142
      %s164 = sphi 0, %s166
      %s167 = sphi 0, %s164
      %s168 = sphi 0, %s167
      %s184 = sphi 0, %s168
      %s190 = sphi 0, %s192
      %s193 = sphi 0, %s190
      %s194 = sphi 0, %s193
      %s210 = sphi 0, %s194
      %s216 = sphi 0, %s218
      %s219 = sphi 0, %s216
      %s220 = sphi 0, %s219
      %s236 = sphi 0, %s220
      %s242 = sphi 0, %s244
      %s245 = sphi 0, %s242
      %s246 = sphi 0, %s245
      %s262 = sphi 0, %s246
      %s268 = sphi 0, %s270
      %s271 = sphi 0, %s268
      %s272 = sphi 0, %s271
      %s288 = sphi 0, %s272
      %s294 = sphi 0, %s296
      %s297 = sphi 0, %s294
      %s298 = sphi 0, %s297
      %s314 = sphi 0, %s298
      %s320 = sphi 0, %s322
      %s323 = sphi 0, %s320
      %s324 = sphi 0, %s323
      %s340 = sphi 0, %s324
      %s346 = sphi 0, %s348
      %s349 = sphi 0, %s346
      %s350 = sphi 0, %s349
      %s366 = sphi 0, %s350
      %s370 = sphi 0, %s370
      %s372 = sphi 0, %s370
      %s373 = sphi 0, %s372
      %s387 = sphi 0, %s373
      %s393 = sphi 0, %s395
      %s396 = sphi 0, %s393
      %s397 = sphi 0, %s396
      %s413 = sphi 0, %s397
    $region4: #{tpu_custom_call.1} parent=1 // loop_header_branch
      %25 = sbr.rel (%p23) target = $region8
    $region5: #{tpu_custom_call.1} parent=1 // loop_body
      %s27 = ssub.s32 %s22, 1
      %s28 = ssub.s32 %s22, 2
      %s35 = sadd.s32 1, %s30
      %p36 = scmp.ge.s32.totalorder %s35, 2
      %s37 = scalar_select %p36, 0, %s35
      %s38 = sadd.s32 1, %s29
      %s39 = scalar_select %p36, %s38, %s29
      %p40 = scmp.ge.s32.totalorder %s39, 1
      %s41 = scalar_select %p40, 0, %s39
      %s42 = ssub.s32 %s29, %s41
      %p43 = scmp.eq.s32.totalorder %s42, 0
      %s45 = sadd.s32 %s44, 1
      %s46 = scalar_select %p43, %s44, %s45
      %p49 = pneg %p43
      %p50 = scmp.eq.s32.totalorder %s22, 1
      %p51 = por %p49, %p50
      %p52 = scmp.ne.s32.totalorder %s44, %s47
      %p53 = scmp.eq.s32.totalorder %s22, 0
      %p54 = por %p52, %p53
      %p55 = scmp.ne.s32.totalorder %s44, %s47
      %p56 = scmp.eq.s32.totalorder %s27, 1
      %p57 = por %p55, %p56
      %p58 = scmp.ne.s32.totalorder %s47, %s48
      %p59 = scmp.eq.s32.totalorder %s27, 0
      %p60 = por %p58, %p59
      %p61 = scmp.ne.s32.totalorder %s47, %s48
      %p62 = scmp.eq.s32.totalorder %s28, 1
      %p63 = por %p61, %p62
      %p65 = scmp.ne.s32.totalorder %s48, %s64
      %p66 = scmp.eq.s32.totalorder %s28, 0
      %p67 = por %p65, %p66
      %s69 = sadd.s32 %s68, 1
      %p72 = scmp.eq.s32.totalorder %s22, 1
      %p73 = scmp.ne.s32.totalorder %s68, %s70
      %p74 = scmp.eq.s32.totalorder %s22, 0
      %p75 = por %p73, %p74
      %p76 = scmp.ne.s32.totalorder %s68, %s70
      %p77 = scmp.eq.s32.totalorder %s27, 1
      %p78 = por %p76, %p77
      %p79 = scmp.ne.s32.totalorder %s70, %s71
      %p80 = scmp.eq.s32.totalorder %s27, 0
      %p81 = por %p79, %p80
      %p82 = scmp.ne.s32.totalorder %s70, %s71
      %p83 = scmp.eq.s32.totalorder %s28, 1
      %p84 = por %p82, %p83
      %p86 = scmp.ne.s32.totalorder %s71, %s85
      %p87 = scmp.eq.s32.totalorder %s28, 0
      %p88 = por %p86, %p87
      %s90 = sadd.s32 %s89, 1
      %p93 = scmp.eq.s32.totalorder %s22, 1
      %p94 = scmp.ne.s32.totalorder %s89, %s91
      %p95 = scmp.eq.s32.totalorder %s22, 0
      %p96 = por %p94, %p95
      %p97 = scmp.ne.s32.totalorder %s89, %s91
      %p98 = scmp.eq.s32.totalorder %s27, 1
      %p99 = por %p97, %p98
      %p100 = scmp.ne.s32.totalorder %s91, %s92
      %p101 = scmp.eq.s32.totalorder %s27, 0
      %p102 = por %p100, %p101
      %p103 = scmp.ne.s32.totalorder %s91, %s92
      %p104 = scmp.eq.s32.totalorder %s28, 1
      %p105 = por %p103, %p104
      %p107 = scmp.ne.s32.totalorder %s92, %s106
      %p108 = scmp.eq.s32.totalorder %s28, 0
      %p109 = por %p107, %p108
      %s110 = ssub.s32 %s30, %s37
      %p111 = scmp.eq.s32.totalorder %s110, 0
      %s113 = sadd.s32 %s112, 1
      %s114 = scalar_select %p111, %s112, %s113
      %p117 = pneg %p111
      %p118 = scmp.eq.s32.totalorder %s22, 1
      %p119 = por %p117, %p118
      %p120 = scmp.ne.s32.totalorder %s112, %s115
      %p121 = scmp.eq.s32.totalorder %s22, 0
      %p122 = por %p120, %p121
      %p123 = scmp.ne.s32.totalorder %s112, %s115
      %p124 = scmp.eq.s32.totalorder %s27, 1
      %p125 = por %p123, %p124
      %p126 = scmp.ne.s32.totalorder %s115, %s116
      %p127 = scmp.eq.s32.totalorder %s27, 0
      %p128 = por %p126, %p127
      %p129 = scmp.ne.s32.totalorder %s115, %s116
      %p130 = scmp.eq.s32.totalorder %s28, 1
      %p131 = por %p129, %p130
      %p133 = scmp.ne.s32.totalorder %s116, %s132
      %p134 = scmp.eq.s32.totalorder %s28, 0
      %p135 = por %p133, %p134
      %s136 = ssub.s32 %s30, %s37
      %p137 = scmp.eq.s32.totalorder %s136, 0
      %s139 = sadd.s32 %s138, 1
      %s140 = scalar_select %p137, %s138, %s139
      %p143 = pneg %p137
      %p144 = scmp.eq.s32.totalorder %s22, 1
      %p145 = por %p143, %p144
      %p146 = scmp.ne.s32.totalorder %s138, %s141
      %p147 = scmp.eq.s32.totalorder %s22, 0
      %p148 = por %p146, %p147
      %p149 = scmp.ne.s32.totalorder %s138, %s141
      %p150 = scmp.eq.s32.totalorder %s27, 1
      %p151 = por %p149, %p150
      %p152 = scmp.ne.s32.totalorder %s141, %s142
      %p153 = scmp.eq.s32.totalorder %s27, 0
      %p154 = por %p152, %p153
      %p155 = scmp.ne.s32.totalorder %s141, %s142
      %p156 = scmp.eq.s32.totalorder %s28, 1
      %p157 = por %p155, %p156
      %p159 = scmp.ne.s32.totalorder %s142, %s158
      %p160 = scmp.eq.s32.totalorder %s28, 0
      %p161 = por %p159, %p160
      %s162 = ssub.s32 %s30, %s37
      %p163 = scmp.eq.s32.totalorder %s162, 0
      %s165 = sadd.s32 %s164, 1
      %s166 = scalar_select %p163, %s164, %s165
      %p169 = pneg %p163
      %p170 = scmp.eq.s32.totalorder %s22, 1
      %p171 = por %p169, %p170
      %p172 = scmp.ne.s32.totalorder %s164, %s167
      %p173 = scmp.eq.s32.totalorder %s22, 0
      %p174 = por %p172, %p173
      %p175 = scmp.ne.s32.totalorder %s164, %s167
      %p176 = scmp.eq.s32.totalorder %s27, 1
      %p177 = por %p175, %p176
      %p178 = scmp.ne.s32.totalorder %s167, %s168
      %p179 = scmp.eq.s32.totalorder %s27, 0
      %p180 = por %p178, %p179
      %p181 = scmp.ne.s32.totalorder %s167, %s168
      %p182 = scmp.eq.s32.totalorder %s28, 1
      %p183 = por %p181, %p182
      %p185 = scmp.ne.s32.totalorder %s168, %s184
      %p186 = scmp.eq.s32.totalorder %s28, 0
      %p187 = por %p185, %p186
      %s188 = ssub.s32 %s30, %s37
      %p189 = scmp.eq.s32.totalorder %s188, 0
      %s191 = sadd.s32 %s190, 1
      %s192 = scalar_select %p189, %s190, %s191
      %p195 = pneg %p189
      %p196 = scmp.eq.s32.totalorder %s22, 1
      %p197 = por %p195, %p196
      %p198 = scmp.ne.s32.totalorder %s190, %s193
      %p199 = scmp.eq.s32.totalorder %s22, 0
      %p200 = por %p198, %p199
      %p201 = scmp.ne.s32.totalorder %s190, %s193
      %p202 = scmp.eq.s32.totalorder %s27, 1
      %p203 = por %p201, %p202
      %p204 = scmp.ne.s32.totalorder %s193, %s194
      %p205 = scmp.eq.s32.totalorder %s27, 0
      %p206 = por %p204, %p205
      %p207 = scmp.ne.s32.totalorder %s193, %s194
      %p208 = scmp.eq.s32.totalorder %s28, 1
      %p209 = por %p207, %p208
      %p211 = scmp.ne.s32.totalorder %s194, %s210
      %p212 = scmp.eq.s32.totalorder %s28, 0
      %p213 = por %p211, %p212
      %s214 = ssub.s32 %s30, %s37
      %p215 = scmp.eq.s32.totalorder %s214, 0
      %s217 = sadd.s32 %s216, 1
      %s218 = scalar_select %p215, %s216, %s217
      %p221 = pneg %p215
      %p222 = scmp.eq.s32.totalorder %s22, 1
      %p223 = por %p221, %p222
      %p224 = scmp.ne.s32.totalorder %s216, %s219
      %p225 = scmp.eq.s32.totalorder %s22, 0
      %p226 = por %p224, %p225
      %p227 = scmp.ne.s32.totalorder %s216, %s219
      %p228 = scmp.eq.s32.totalorder %s27, 1
      %p229 = por %p227, %p228
      %p230 = scmp.ne.s32.totalorder %s219, %s220
      %p231 = scmp.eq.s32.totalorder %s27, 0
      %p232 = por %p230, %p231
      %p233 = scmp.ne.s32.totalorder %s219, %s220
      %p234 = scmp.eq.s32.totalorder %s28, 1
      %p235 = por %p233, %p234
      %p237 = scmp.ne.s32.totalorder %s220, %s236
      %p238 = scmp.eq.s32.totalorder %s28, 0
      %p239 = por %p237, %p238
      %s240 = ssub.s32 %s30, %s37
      %p241 = scmp.eq.s32.totalorder %s240, 0
      %s243 = sadd.s32 %s242, 1
      %s244 = scalar_select %p241, %s242, %s243
      %p247 = pneg %p241
      %p248 = scmp.eq.s32.totalorder %s22, 1
      %p249 = por %p247, %p248
      %p250 = scmp.ne.s32.totalorder %s242, %s245
      %p251 = scmp.eq.s32.totalorder %s22, 0
      %p252 = por %p250, %p251
      %p253 = scmp.ne.s32.totalorder %s242, %s245
      %p254 = scmp.eq.s32.totalorder %s27, 1
      %p255 = por %p253, %p254
      %p256 = scmp.ne.s32.totalorder %s245, %s246
      %p257 = scmp.eq.s32.totalorder %s27, 0
      %p258 = por %p256, %p257
      %p259 = scmp.ne.s32.totalorder %s245, %s246
      %p260 = scmp.eq.s32.totalorder %s28, 1
      %p261 = por %p259, %p260
      %p263 = scmp.ne.s32.totalorder %s246, %s262
      %p264 = scmp.eq.s32.totalorder %s28, 0
      %p265 = por %p263, %p264
      %s266 = ssub.s32 %s30, %s37
      %p267 = scmp.eq.s32.totalorder %s266, 0
      %s269 = sadd.s32 %s268, 1
      %s270 = scalar_select %p267, %s268, %s269
      %p273 = pneg %p267
      %p274 = scmp.eq.s32.totalorder %s22, 1
      %p275 = por %p273, %p274
      %p276 = scmp.ne.s32.totalorder %s268, %s271
      %p277 = scmp.eq.s32.totalorder %s22, 0
      %p278 = por %p276, %p277
      %p279 = scmp.ne.s32.totalorder %s268, %s271
      %p280 = scmp.eq.s32.totalorder %s27, 1
      %p281 = por %p279, %p280
      %p282 = scmp.ne.s32.totalorder %s271, %s272
      %p283 = scmp.eq.s32.totalorder %s27, 0
      %p284 = por %p282, %p283
      %p285 = scmp.ne.s32.totalorder %s271, %s272
      %p286 = scmp.eq.s32.totalorder %s28, 1
      %p287 = por %p285, %p286
      %p289 = scmp.ne.s32.totalorder %s272, %s288
      %p290 = scmp.eq.s32.totalorder %s28, 0
      %p291 = por %p289, %p290
      %s292 = ssub.s32 %s30, %s37
      %p293 = scmp.eq.s32.totalorder %s292, 0
      %s295 = sadd.s32 %s294, 1
      %s296 = scalar_select %p293, %s294, %s295
      %p299 = pneg %p293
      %p300 = scmp.eq.s32.totalorder %s22, 1
      %p301 = por %p299, %p300
      %p302 = scmp.ne.s32.totalorder %s294, %s297
      %p303 = scmp.eq.s32.totalorder %s22, 0
      %p304 = por %p302, %p303
      %p305 = scmp.ne.s32.totalorder %s294, %s297
      %p306 = scmp.eq.s32.totalorder %s27, 1
      %p307 = por %p305, %p306
      %p308 = scmp.ne.s32.totalorder %s297, %s298
      %p309 = scmp.eq.s32.totalorder %s27, 0
      %p310 = por %p308, %p309
      %p311 = scmp.ne.s32.totalorder %s297, %s298
      %p312 = scmp.eq.s32.totalorder %s28, 1
      %p313 = por %p311, %p312
      %p315 = scmp.ne.s32.totalorder %s298, %s314
      %p316 = scmp.eq.s32.totalorder %s28, 0
      %p317 = por %p315, %p316
      %s318 = ssub.s32 %s30, %s37
      %p319 = scmp.eq.s32.totalorder %s318, 0
      %s321 = sadd.s32 %s320, 1
      %s322 = scalar_select %p319, %s320, %s321
      %p325 = pneg %p319
      %p326 = scmp.eq.s32.totalorder %s22, 1
      %p327 = por %p325, %p326
      %p328 = scmp.ne.s32.totalorder %s320, %s323
      %p329 = scmp.eq.s32.totalorder %s22, 0
      %p330 = por %p328, %p329
      %p331 = scmp.ne.s32.totalorder %s320, %s323
      %p332 = scmp.eq.s32.totalorder %s27, 1
      %p333 = por %p331, %p332
      %p334 = scmp.ne.s32.totalorder %s323, %s324
      %p335 = scmp.eq.s32.totalorder %s27, 0
      %p336 = por %p334, %p335
      %p337 = scmp.ne.s32.totalorder %s323, %s324
      %p338 = scmp.eq.s32.totalorder %s28, 1
      %p339 = por %p337, %p338
      %p341 = scmp.ne.s32.totalorder %s324, %s340
      %p342 = scmp.eq.s32.totalorder %s28, 0
      %p343 = por %p341, %p342
      %s344 = ssub.s32 %s30, %s37
      %p345 = scmp.eq.s32.totalorder %s344, 0
      %s347 = sadd.s32 %s346, 1
      %s348 = scalar_select %p345, %s346, %s347
      %p351 = pneg %p345
      %p352 = scmp.eq.s32.totalorder %s22, 1
      %p353 = por %p351, %p352
      %p354 = scmp.ne.s32.totalorder %s346, %s349
      %p355 = scmp.eq.s32.totalorder %s22, 0
      %p356 = por %p354, %p355
      %p357 = scmp.ne.s32.totalorder %s346, %s349
      %p358 = scmp.eq.s32.totalorder %s27, 1
      %p359 = por %p357, %p358
      %p360 = scmp.ne.s32.totalorder %s349, %s350
      %p361 = scmp.eq.s32.totalorder %s27, 0
      %p362 = por %p360, %p361
      %p363 = scmp.ne.s32.totalorder %s349, %s350
      %p364 = scmp.eq.s32.totalorder %s28, 1
      %p365 = por %p363, %p364
      %p367 = scmp.ne.s32.totalorder %s350, %s366
      %p368 = scmp.eq.s32.totalorder %s28, 0
      %p369 = por %p367, %p368
      %s371 = sadd.s32 %s370, 1
      %p374 = scmp.eq.s32.totalorder %s22, 1
      %p375 = scmp.ne.s32.totalorder %s370, %s372
      %p376 = scmp.eq.s32.totalorder %s22, 0
      %p377 = por %p375, %p376
      %p378 = scmp.ne.s32.totalorder %s370, %s372
      %p379 = scmp.eq.s32.totalorder %s27, 1
      %p380 = por %p378, %p379
      %p381 = scmp.ne.s32.totalorder %s372, %s373
      %p382 = scmp.eq.s32.totalorder %s27, 0
      %p383 = por %p381, %p382
      %p384 = scmp.ne.s32.totalorder %s372, %s373
      %p385 = scmp.eq.s32.totalorder %s28, 1
      %p386 = por %p384, %p385
      %p388 = scmp.ne.s32.totalorder %s373, %s387
      %p389 = scmp.eq.s32.totalorder %s28, 0
      %p390 = por %p388, %p389
      %s391 = ssub.s32 %s29, %s41
      %p392 = scmp.eq.s32.totalorder %s391, 0
      %s394 = sadd.s32 %s393, 1
      %s395 = scalar_select %p392, %s393, %s394
      %p398 = pneg %p392
      %p399 = scmp.eq.s32.totalorder %s22, 1
      %p400 = por %p398, %p399
      %p401 = scmp.ne.s32.totalorder %s393, %s396
      %p402 = scmp.eq.s32.totalorder %s22, 0
      %p403 = por %p401, %p402
      %p404 = scmp.ne.s32.totalorder %s393, %s396
      %p405 = scmp.eq.s32.totalorder %s27, 1
      %p406 = por %p404, %p405
      %p407 = scmp.ne.s32.totalorder %s396, %s397
      %p408 = scmp.eq.s32.totalorder %s27, 0
      %p409 = por %p407, %p408
      %p410 = scmp.ne.s32.totalorder %s396, %s397
      %p411 = scmp.eq.s32.totalorder %s28, 1
      %p412 = por %p410, %p411
      %p414 = scmp.ne.s32.totalorder %s397, %s413
      %p415 = scmp.eq.s32.totalorder %s28, 0
      %p416 = por %p414, %p415
      %p417 = scmp.le.s32.totalorder 1, %s22
      %p418 = scmp.lt.s32.totalorder %s22, 3
      %p419 = pnand %p417, %p418
      %p420 = pneg %p419
      // Predicated region
      $region9: #{tpu_custom_call.1} parent=5 // pred_check
        _
      $region10: #{tpu_custom_call.1} parent=5 // pred_check_branch
        %422 = sbr.rel (%p419) target = $region12
      $region11: #{tpu_custom_call.1} parent=5 // pred_region
        %s423 = ssub.s32 %s22, 1
        // Predicated region
        $region13: #{tpu_custom_call.1} parent=11 // pred_check
          %p424 = pneg %p60
        $region14: #{tpu_custom_call.1} parent=11 // pred_check_branch
          %426 = sbr.rel (%p424) target = $region16
        $region15: #{tpu_custom_call.1} parent=11 // pred_region
          %s427 = smul.u32 2, %s31
          %s429 = ssub.s32 256, 256
          %430 = vsyncadd [#allocation5], %s429
          %s431 = smul.addr %s427, 128
          %s432 = scalar_lea.hbm %s0, %s431
          %s433 = sshll.u32 [#allocation4], 4
          %s434 = int_to_ptr.vmem [resolvable:$true] %s433
          %439 = dma.hbm_to_vmem [thread:$0]  %s432, 256, %s434, [#allocation5], 128, 128, 8
        $region16: #{tpu_custom_call.1} parent=11 // pred_fallthru
          _
        // Predicated region
        $region17: #{tpu_custom_call.1} parent=11 // pred_check
          %p440 = pneg %p81
        $region18: #{tpu_custom_call.1} parent=11 // pred_check_branch
          %442 = sbr.rel (%p440) target = $region20
        $region19: #{tpu_custom_call.1} parent=11 // pred_region
          _
        $region20: #{tpu_custom_call.1} parent=11 // pred_fallthru
          _
        // Predicated region
        $region21: #{tpu_custom_call.1} parent=11 // pred_check
          %p443 = pneg %p102
        $region22: #{tpu_custom_call.1} parent=11 // pred_check_branch
          %445 = sbr.rel (%p443) target = $region24
        $region23: #{tpu_custom_call.1} parent=11 // pred_region
          _
        $region24: #{tpu_custom_call.1} parent=11 // pred_fallthru
          _
        // Predicated region
        $region25: #{tpu_custom_call.1} parent=11 // pred_check
          %p446 = pneg %p383
        $region26: #{tpu_custom_call.1} parent=11 // pred_check_branch
          %448 = sbr.rel (%p446) target = $region28
        $region27: #{tpu_custom_call.1} parent=11 // pred_region
          _
        $region28: #{tpu_custom_call.1} parent=11 // pred_fallthru
          _
      $region12: #{tpu_custom_call.1} parent=5 // pred_fallthru
        _
      %p449 = scmp.lt.s32.totalorder %s22, 2
      // Predicated region
      $region29: #{tpu_custom_call.1} parent=5 // pred_check
        %p450 = pneg %p449
      $region30: #{tpu_custom_call.1} parent=5 // pred_check_branch
        %452 = sbr.rel (%p450) target = $region32
      $region31: #{tpu_custom_call.1} parent=5 // pred_region
        // Predicated region
        $region33: #{tpu_custom_call.1} parent=31 // pred_check
          %p453 = pneg %p122
        $region34: #{tpu_custom_call.1} parent=31 // pred_check_branch
          %455 = sbr.rel (%p453) target = $region36
        $region35: #{tpu_custom_call.1} parent=31 // pred_region
          %p456 = scmp.lt.s32.totalorder %s30, 1
          %s457 = scalar_select %p456, %s30, 1
          %s458 = scalar_lea.vmem %s3, %s457
        $region36: #{tpu_custom_call.1} parent=31 // pred_fallthru
          _
        // Predicated region
        $region37: #{tpu_custom_call.1} parent=31 // pred_check
          %p459 = pneg %p148
        $region38: #{tpu_custom_call.1} parent=31 // pred_check_branch
          %461 = sbr.rel (%p459) target = $region40
        $region39: #{tpu_custom_call.1} parent=31 // pred_region
          %p462 = scmp.lt.s32.totalorder %s30, 1
          %s463 = scalar_select %p462, %s30, 1
          %s464 = smul.addr %s463, 4
          %s465 = smul.addr %s464, 4
          %s466 = scalar_lea.vmem %s4, %s465
        $region40: #{tpu_custom_call.1} parent=31 // pred_fallthru
          _
        // Predicated region
        $region41: #{tpu_custom_call.1} parent=31 // pred_check
          %p467 = pneg %p174
        $region42: #{tpu_custom_call.1} parent=31 // pred_check_branch
          %469 = sbr.rel (%p467) target = $region44
        $region43: #{tpu_custom_call.1} parent=31 // pred_region
          %p470 = scmp.lt.s32.totalorder %s30, 1
          %s471 = scalar_select %p470, %s30, 1
          %s472 = smul.addr %s471, 4
          %s473 = smul.addr %s472, 4
          %s474 = scalar_lea.vmem %s5, %s473
        $region44: #{tpu_custom_call.1} parent=31 // pred_fallthru
          _
        // Predicated region
        $region45: #{tpu_custom_call.1} parent=31 // pred_check
          %p475 = pneg %p200
        $region46: #{tpu_custom_call.1} parent=31 // pred_check_branch
          %477 = sbr.rel (%p475) target = $region48
        $region47: #{tpu_custom_call.1} parent=31 // pred_region
          %p478 = scmp.lt.s32.totalorder %s30, 1
          %s479 = scalar_select %p478, %s30, 1
          %s480 = smul.addr %s479, 4
          %s481 = smul.addr %s480, 4
          %s482 = scalar_lea.vmem %s6, %s481
        $region48: #{tpu_custom_call.1} parent=31 // pred_fallthru
          _
        // Predicated region
        $region49: #{tpu_custom_call.1} parent=31 // pred_check
          %p483 = pneg %p226
        $region50: #{tpu_custom_call.1} parent=31 // pred_check_branch
          %485 = sbr.rel (%p483) target = $region52
        $region51: #{tpu_custom_call.1} parent=31 // pred_region
          %p486 = scmp.lt.s32.totalorder %s30, 1
          %s487 = scalar_select %p486, %s30, 1
          %s488 = smul.addr %s487, 4
          %s489 = smul.addr %s488, 4
          %s490 = scalar_lea.vmem %s7, %s489
        $region52: #{tpu_custom_call.1} parent=31 // pred_fallthru
          _
        // Predicated region
        $region53: #{tpu_custom_call.1} parent=31 // pred_check
          %p491 = pneg %p252
        $region54: #{tpu_custom_call.1} parent=31 // pred_check_branch
          %493 = sbr.rel (%p491) target = $region56
        $region55: #{tpu_custom_call.1} parent=31 // pred_region
          %p494 = scmp.lt.s32.totalorder %s30, 1
          %s495 = scalar_select %p494, %s30, 1
          %s496 = scalar_lea.vmem %s8, %s495
        $region56: #{tpu_custom_call.1} parent=31 // pred_fallthru
          _
        // Predicated region
        $region57: #{tpu_custom_call.1} parent=31 // pred_check
          %p497 = pneg %p278
        $region58: #{tpu_custom_call.1} parent=31 // pred_check_branch
          %499 = sbr.rel (%p497) target = $region60
        $region59: #{tpu_custom_call.1} parent=31 // pred_region
          %p500 = scmp.lt.s32.totalorder %s30, 1
          %s501 = scalar_select %p500, %s30, 1
          %s502 = smul.addr %s501, 4
          %s503 = smul.addr %s502, 4
          %s504 = scalar_lea.vmem %s9, %s503
        $region60: #{tpu_custom_call.1} parent=31 // pred_fallthru
          _
        // Predicated region
        $region61: #{tpu_custom_call.1} parent=31 // pred_check
          %p505 = pneg %p304
        $region62: #{tpu_custom_call.1} parent=31 // pred_check_branch
          %507 = sbr.rel (%p505) target = $region64
        $region63: #{tpu_custom_call.1} parent=31 // pred_region
          %p508 = scmp.lt.s32.totalorder %s30, 1
          %s509 = scalar_select %p508, %s30, 1
          %s510 = scalar_lea.vmem %s10, %s509
        $region64: #{tpu_custom_call.1} parent=31 // pred_fallthru
          _
        // Predicated region
        $region65: #{tpu_custom_call.1} parent=31 // pred_check
          %p511 = pneg %p330
        $region66: #{tpu_custom_call.1} parent=31 // pred_check_branch
          %513 = sbr.rel (%p511) target = $region68
        $region67: #{tpu_custom_call.1} parent=31 // pred_region
          %p514 = scmp.lt.s32.totalorder %s30, 1
          %s515 = scalar_select %p514, %s30, 1
          %s516 = smul.addr %s515, 16
          %s517 = smul.addr %s516, 4
          %s518 = scalar_lea.vmem %s11, %s517
        $region68: #{tpu_custom_call.1} parent=31 // pred_fallthru
          _
        // Predicated region
        $region69: #{tpu_custom_call.1} parent=31 // pred_check
          %p519 = pneg %p356
        $region70: #{tpu_custom_call.1} parent=31 // pred_check_branch
          %521 = sbr.rel (%p519) target = $region72
        $region71: #{tpu_custom_call.1} parent=31 // pred_region
          %p522 = scmp.lt.s32.totalorder %s30, 1
          %s523 = scalar_select %p522, %s30, 1
          %s524 = scalar_lea.vmem %s12, %s523
        $region72: #{tpu_custom_call.1} parent=31 // pred_fallthru
          _
      $region32: #{tpu_custom_call.1} parent=5 // pred_fallthru
        _
      %p525 = scmp.le.s32.totalorder 1, %s22
      %p526 = scmp.lt.s32.totalorder %s22, 3
      %p527 = pnand %p525, %p526
      %p528 = pneg %p527
      // Predicated region
      $region73: #{tpu_custom_call.1} parent=5 // pred_check
        _
      $region74: #{tpu_custom_call.1} parent=5 // pred_check_branch
        %530 = sbr.rel (%p527) target = $region76
      $region75: #{tpu_custom_call.1} parent=5 // pred_region
        %s531 = ssub.s32 %s22, 1
        // Predicated region
        $region77: #{tpu_custom_call.1} parent=75 // pred_check
          %p532 = pneg %p60
        $region78: #{tpu_custom_call.1} parent=75 // pred_check_branch
          %534 = sbr.rel (%p532) target = $region80
        $region79: #{tpu_custom_call.1} parent=75 // pred_region
          %535 = dma.done [#allocation5], 256
        $region80: #{tpu_custom_call.1} parent=75 // pred_fallthru
          _
        %p536 = pneg %p60
        %p537 = pneg %p57
        %p538 = pneg %p81
        %p539 = pneg %p78
        %p540 = pneg %p102
        %p541 = pneg %p99
        %p542 = scmp.lt.s32.totalorder %s32, 1
        %s543 = scalar_select %p542, %s32, 1
        %s544 = scalar_lea.vmem %s3, %s543
        %p545 = pneg %p128
        %p546 = pneg %p125
        %p547 = scmp.lt.s32.totalorder %s32, 1
        %s548 = scalar_select %p547, %s32, 1
        %s549 = smul.addr %s548, 4
        %s550 = smul.addr %s549, 4
        %s551 = scalar_lea.vmem %s4, %s550
        %p552 = pneg %p154
        %p553 = pneg %p151
        %p554 = scmp.lt.s32.totalorder %s32, 1
        %s555 = scalar_select %p554, %s32, 1
        %s556 = smul.addr %s555, 4
        %s557 = smul.addr %s556, 4
        %s558 = scalar_lea.vmem %s5, %s557
        %p559 = pneg %p180
        %p560 = pneg %p177
        %p561 = scmp.lt.s32.totalorder %s32, 1
        %s562 = scalar_select %p561, %s32, 1
        %s563 = smul.addr %s562, 4
        %s564 = smul.addr %s563, 4
        %s565 = scalar_lea.vmem %s6, %s564
        %p566 = pneg %p206
        %p567 = pneg %p203
        %p568 = scmp.lt.s32.totalorder %s32, 1
        %s569 = scalar_select %p568, %s32, 1
        %s570 = smul.addr %s569, 4
        %s571 = smul.addr %s570, 4
        %s572 = scalar_lea.vmem %s7, %s571
        %p573 = pneg %p232
        %p574 = pneg %p229
        %p575 = scmp.lt.s32.totalorder %s32, 1
        %s576 = scalar_select %p575, %s32, 1
        %s577 = scalar_lea.vmem %s8, %s576
        %p578 = pneg %p258
        %p579 = pneg %p255
        %p580 = scmp.lt.s32.totalorder %s32, 1
        %s581 = scalar_select %p580, %s32, 1
        %s582 = smul.addr %s581, 4
        %s583 = smul.addr %s582, 4
        %s584 = scalar_lea.vmem %s9, %s583
        %p585 = pneg %p284
        %p586 = pneg %p281
        %p587 = scmp.lt.s32.totalorder %s32, 1
        %s588 = scalar_select %p587, %s32, 1
        %s589 = scalar_lea.vmem %s10, %s588
        %p590 = pneg %p310
        %p591 = pneg %p307
        %p592 = scmp.lt.s32.totalorder %s32, 1
        %s593 = scalar_select %p592, %s32, 1
        %s594 = smul.addr %s593, 16
        %s595 = smul.addr %s594, 4
        %s596 = scalar_lea.vmem %s11, %s595
        %p597 = pneg %p336
        %p598 = pneg %p333
        %p599 = scmp.lt.s32.totalorder %s32, 1
        %s600 = scalar_select %p599, %s32, 1
        %s601 = scalar_lea.vmem %s12, %s600
        %p602 = pneg %p362
        %p603 = pneg %p359
        %p604 = pneg %p383
        %p605 = pneg %p380
        %p606 = pneg %p409
        %p607 = pneg %p406
        %s608 = smul.u32 2, %s31
        %p609 = scmp.lt.s32.totalorder %s32, 1
        %s610 = scalar_select %p609, %s32, 1
        %s611 = scalar_lea.vmem %s3, %s610
        %p612 = scmp.lt.s32.totalorder %s32, 1
        %s613 = scalar_select %p612, %s32, 1
        %s614 = smul.addr %s613, 4
        %s615 = smul.addr %s614, 4
        %s616 = scalar_lea.vmem %s4, %s615
        %p617 = scmp.lt.s32.totalorder %s32, 1
        %s618 = scalar_select %p617, %s32, 1
        %s619 = smul.addr %s618, 4
        %s620 = smul.addr %s619, 4
        %s621 = scalar_lea.vmem %s5, %s620
        %p622 = scmp.lt.s32.totalorder %s32, 1
        %s623 = scalar_select %p622, %s32, 1
        %s624 = smul.addr %s623, 4
        %s625 = smul.addr %s624, 4
        %s626 = scalar_lea.vmem %s6, %s625
        %p627 = scmp.lt.s32.totalorder %s32, 1
        %s628 = scalar_select %p627, %s32, 1
        %s629 = smul.addr %s628, 4
        %s630 = smul.addr %s629, 4
        %s631 = scalar_lea.vmem %s7, %s630
        %p632 = scmp.lt.s32.totalorder %s32, 1
        %s633 = scalar_select %p632, %s32, 1
        %s634 = scalar_lea.vmem %s8, %s633
        %p635 = scmp.lt.s32.totalorder %s32, 1
        %s636 = scalar_select %p635, %s32, 1
        %s637 = smul.addr %s636, 4
        %s638 = smul.addr %s637, 4
        %s639 = scalar_lea.vmem %s9, %s638
        %p640 = scmp.lt.s32.totalorder %s32, 1
        %s641 = scalar_select %p640, %s32, 1
        %s642 = scalar_lea.vmem %s10, %s641
        %p643 = scmp.lt.s32.totalorder %s32, 1
        %s644 = scalar_select %p643, %s32, 1
        %s645 = smul.addr %s644, 16
        %s646 = smul.addr %s645, 4
        %s647 = scalar_lea.vmem %s11, %s646
        %p648 = scmp.lt.s32.totalorder %s32, 1
        %s649 = scalar_select %p648, %s32, 1
        %s650 = scalar_lea.vmem %s12, %s649
        %s651 = smul.u32 2, %s31
        %p653 = scmp.eq.s32.totalorder %s32, 0
        // Predicated region
        $region81: #{tpu_custom_call.1} parent=75 // pred_check
          %p654 = pneg %p653
        $region82: #{tpu_custom_call.1} parent=75 // pred_check_branch
          %656 = sbr.rel (%p654) target = $region84
        $region83: #{tpu_custom_call.1} parent=75 // pred_region
          %v657 = vld [vmem:[#allocation4] sm:$0xff]
          %v658 = vld [vmem:[#allocation4 + $0x8] sm:$0xff]
          %vm659 = vcmask 261120
          %660 = vst.msk [vmem:[#allocation2] sm:$0xff] %vm659, %v657
          %661 = vst.msk [vmem:[#allocation2 + $0x8] sm:$0xff] %vm659, %v658
        $region84: #{tpu_custom_call.1} parent=75 // pred_fallthru
          _
        %v662 = vld [vmem:[#allocation2] sm:$0xff]
        %v663 = vld [vmem:[#allocation2 + $0x8] sm:$0xff]
        %v664 = vld [vmem:[%s1] sm:$0xff]
        %v665 = vld [vmem:[%s2] sm:$0xff]
        %667 = vrot.lane.b32.xlu0 %v664, 8
        %v668 = vpop.permute.xlu0 %667
        %vm670 = vcmask 64512
        %v671 = vsel %vm670, %v664, %v668
        %673 = vrot.lane.b32.xlu0 %v665, 8
        %v674 = vpop.permute.xlu0 %673
        %v676 = vsel %vm670, %v665, %v674
        %v677 = vld [vmem:[%s611] sm:$0x1]
        %v678 = vmul.f32 %v662, %v662
        %v679 = vmul.f32 %v663, %v663
        %vm680 = vcmask 261120
        %v681 = vsel %vm680, %v678, 0.0
        %682 = vadd.xlane.f32.xlu0 %v681
        %v683 = vpop.xlane.xlu0 %682
        %v684 = vsel %vm680, %v679, 0.0
        %685 = vadd.xlane.f32.xlu0 %v684
        %v686 = vpop.xlane.xlu0 %685
        %v687 = vmax.f32 %v683, 1e-24
        %v688 = vmax.f32 %v686, 1e-24
        %v689 = vrsqrt.pop %v687
        %v690 = vrsqrt.pop %v688
        %v691 = vmul.f32 %v662, %v689
        %v692 = vmul.f32 %v663, %v690
        %v694 = vlaneseq
        %v695 = vshrl.u32 %v694, 7
        %v696 = vsub.s32 0, %v695
        %v697 = vrot.slane %v677, %v696
        %v699 = vmul.f32 %v691, %v697
        %v700 = vmul.f32 %v692, %v697
        %v701 = vpack.c.bf16 %v700, %v699
        %v702 = vld [vmem:[%s616] sm:$0xf]
        %v703 = vld [vmem:[%s616 + $0x4] sm:$0xf]
        %v704 = vld [vmem:[%s616 + $0x8] sm:$0xf]
        %v705 = vld [vmem:[%s616 + $0xc] sm:$0xf]
        %v710 = vunpack.c.l.b16 %v702
        %v711 = vunpack.c.l.b16 %v703
        %v712 = vunpack.c.l.b16 %v704
        %v713 = vunpack.c.l.b16 %v705
        %v714 = vpack.c.b16 %v711, %v710
        %v715 = vpack.c.b16 %v713, %v712
        %v719 = vsel %vm680, %v701, 0
        %721 = vmatprep.subr.bf16.mxu0 0
        %722 = vmatpush1.bf16.msra.mxu0 %v714
        %723 = vmatprep.subr.bf16.mxu0 0
        %724 = vmatpush1.bf16.msra.mxu0 %v715
        %725 = vmatprep.subr.bf16.mxu0 0
        %726 = vmatpush1.bf16.msra.mxu0 0
        %727 = vmatprep.subr.bf16.mxu0 0
        %728 = vmatpush1.bf16.msra.mxu0 0
        %729 = vmatprep.subr.bf16.mxu0 0
        %730 = vmatpush1.bf16.msra.mxu0 0
        %731 = vmatprep.subr.bf16.mxu0 0
        %732 = vmatpush1.bf16.msra.mxu0 0
        %733 = vmatprep.subr.bf16.mxu0 0
        %734 = vmatpush1.bf16.msra.mxu0 0
        %735 = vmatprep.subr.bf16.mxu0 0
        %736 = vmatpush1.bf16.msra.mxu0 0
        %737 = vmatprep.subr.bf16.mxu0 0
        %738 = vmatpush1.bf16.msra.mxu0 0
        %739 = vmatprep.subr.bf16.mxu0 0
        %740 = vmatpush1.bf16.msra.mxu0 0
        %741 = vmatprep.subr.bf16.mxu0 0
        %742 = vmatpush1.bf16.msra.mxu0 0
        %743 = vmatprep.subr.bf16.mxu0 0
        %744 = vmatpush1.bf16.msra.mxu0 0
        %745 = vmatprep.subr.bf16.mxu0 0
        %746 = vmatpush1.bf16.msra.mxu0 0
        %747 = vmatprep.subr.bf16.mxu0 0
        %748 = vmatpush1.bf16.msra.mxu0 0
        %749 = vmatprep.subr.bf16.mxu0 0
        %750 = vmatpush1.bf16.msra.mxu0 0
        %751 = vmatprep.subr.bf16.mxu0 0
        %752 = vmatpush1.bf16.msra.mxu0 0
        %753 = vmatprep.mubr.bf16.mxu0 0
        %754 = vmatmul.mubr.bf16.gmra.mrb[0].mxu0 %v719
        %v755 = vpop.f32.mrb[0].mxu0
        %v756 = vadd.f32 0.0, %v755
        %v757 = vpop.f32.mrb[0].mxu0
        %v758 = vpop.f32.mrb[0].mxu0
        %v759 = vadd.f32 0.0, %v758
        %v760 = vpop.f32.mrb[0].mxu0
        %761 = vdwg.mxu0
        %v762 = vld [vmem:[%s621] sm:$0xf]
        %v763 = vld [vmem:[%s621 + $0x4] sm:$0xf]
        %v764 = vld [vmem:[%s621 + $0x8] sm:$0xf]
        %v765 = vld [vmem:[%s621 + $0xc] sm:$0xf]
        %v770 = vunpack.c.l.b16 %v762
        %v771 = vunpack.c.l.b16 %v763
        %v772 = vunpack.c.l.b16 %v764
        %v773 = vunpack.c.l.b16 %v765
        %v774 = vpack.c.b16 %v771, %v770
        %v775 = vpack.c.b16 %v773, %v772
        %778 = vmatprep.subr.bf16.mxu0 0
        %779 = vmatpush1.bf16.msra.mxu0 %v774
        %780 = vmatprep.subr.bf16.mxu0 0
        %781 = vmatpush1.bf16.msra.mxu0 %v775
        %782 = vmatprep.subr.bf16.mxu0 0
        %783 = vmatpush1.bf16.msra.mxu0 0
        %784 = vmatprep.subr.bf16.mxu0 0
        %785 = vmatpush1.bf16.msra.mxu0 0
        %786 = vmatprep.subr.bf16.mxu0 0
        %787 = vmatpush1.bf16.msra.mxu0 0
        %788 = vmatprep.subr.bf16.mxu0 0
        %789 = vmatpush1.bf16.msra.mxu0 0
        %790 = vmatprep.subr.bf16.mxu0 0
        %791 = vmatpush1.bf16.msra.mxu0 0
        %792 = vmatprep.subr.bf16.mxu0 0
        %793 = vmatpush1.bf16.msra.mxu0 0
        %794 = vmatprep.subr.bf16.mxu0 0
        %795 = vmatpush1.bf16.msra.mxu0 0
        %796 = vmatprep.subr.bf16.mxu0 0
        %797 = vmatpush1.bf16.msra.mxu0 0
        %798 = vmatprep.subr.bf16.mxu0 0
        %799 = vmatpush1.bf16.msra.mxu0 0
        %800 = vmatprep.subr.bf16.mxu0 0
        %801 = vmatpush1.bf16.msra.mxu0 0
        %802 = vmatprep.subr.bf16.mxu0 0
        %803 = vmatpush1.bf16.msra.mxu0 0
        %804 = vmatprep.subr.bf16.mxu0 0
        %805 = vmatpush1.bf16.msra.mxu0 0
        %806 = vmatprep.subr.bf16.mxu0 0
        %807 = vmatpush1.bf16.msra.mxu0 0
        %808 = vmatprep.subr.bf16.mxu0 0
        %809 = vmatpush1.bf16.msra.mxu0 0
        %810 = vmatprep.mubr.bf16.mxu0 0
        %811 = vmatmul.mubr.bf16.gmra.mrb[0].mxu0 %v719
        %v812 = vpop.f32.mrb[0].mxu0
        %v813 = vadd.f32 0.0, %v812
        %v814 = vpop.f32.mrb[0].mxu0
        %v815 = vpop.f32.mrb[0].mxu0
        %v816 = vadd.f32 0.0, %v815
        %v817 = vpop.f32.mrb[0].mxu0
        %818 = vdwg.mxu0
        %v819 = vld [vmem:[%s626] sm:$0xf]
        %v820 = vld [vmem:[%s626 + $0x4] sm:$0xf]
        %v821 = vld [vmem:[%s626 + $0x8] sm:$0xf]
        %v822 = vld [vmem:[%s626 + $0xc] sm:$0xf]
        %v827 = vunpack.c.l.b16 %v819
        %v828 = vunpack.c.l.b16 %v820
        %v829 = vunpack.c.l.b16 %v821
        %v830 = vunpack.c.l.b16 %v822
        %v831 = vpack.c.b16 %v828, %v827
        %v832 = vpack.c.b16 %v830, %v829
        %835 = vmatprep.subr.bf16.mxu0 0
        %836 = vmatpush1.bf16.msra.mxu0 %v831
        %837 = vmatprep.subr.bf16.mxu0 0
        %838 = vmatpush1.bf16.msra.mxu0 %v832
        %839 = vmatprep.subr.bf16.mxu0 0
        %840 = vmatpush1.bf16.msra.mxu0 0
        %841 = vmatprep.subr.bf16.mxu0 0
        %842 = vmatpush1.bf16.msra.mxu0 0
        %843 = vmatprep.subr.bf16.mxu0 0
        %844 = vmatpush1.bf16.msra.mxu0 0
        %845 = vmatprep.subr.bf16.mxu0 0
        %846 = vmatpush1.bf16.msra.mxu0 0
        %847 = vmatprep.subr.bf16.mxu0 0
        %848 = vmatpush1.bf16.msra.mxu0 0
        %849 = vmatprep.subr.bf16.mxu0 0
        %850 = vmatpush1.bf16.msra.mxu0 0
        %851 = vmatprep.subr.bf16.mxu0 0
        %852 = vmatpush1.bf16.msra.mxu0 0
        %853 = vmatprep.subr.bf16.mxu0 0
        %854 = vmatpush1.bf16.msra.mxu0 0
        %855 = vmatprep.subr.bf16.mxu0 0
        %856 = vmatpush1.bf16.msra.mxu0 0
        %857 = vmatprep.subr.bf16.mxu0 0
        %858 = vmatpush1.bf16.msra.mxu0 0
        %859 = vmatprep.subr.bf16.mxu0 0
        %860 = vmatpush1.bf16.msra.mxu0 0
        %861 = vmatprep.subr.bf16.mxu0 0
        %862 = vmatpush1.bf16.msra.mxu0 0
        %863 = vmatprep.subr.bf16.mxu0 0
        %864 = vmatpush1.bf16.msra.mxu0 0
        %865 = vmatprep.subr.bf16.mxu0 0
        %866 = vmatpush1.bf16.msra.mxu0 0
        %867 = vmatprep.mubr.bf16.mxu0 0
        %868 = vmatmul.mubr.bf16.gmra.mrb[0].mxu0 %v719
        %v869 = vpop.f32.mrb[0].mxu0
        %v870 = vadd.f32 0.0, %v869
        %v871 = vpop.f32.mrb[0].mxu0
        %v872 = vpop.f32.mrb[0].mxu0
        %v873 = vadd.f32 0.0, %v872
        %v874 = vpop.f32.mrb[0].mxu0
        %875 = vdwg.mxu0
        %v876 = vmul.f32 %v756, %v671
        %v877 = vmul.f32 %v759, %v671
        %879 = vrot.lane.b32.xlu0 %v676, 16
        %v880 = vpop.permute.xlu0 %879
        %v882 = vmul.f32 %v756, %v880
        %v883 = vmul.f32 %v759, %v880
        %886 = vrot.lane.b32.xlu0 %v882, 112
        %v887 = vpop.permute.xlu0 %886
        %888 = vrot.lane.b32.xlu0 %v883, 112
        %v889 = vpop.permute.xlu0 %888
        %v892 = vsub.f32 %v876, %v887
        %v893 = vsub.f32 %v877, %v889
        %895 = vrot.lane.b32.xlu0 %v671, 16
        %v896 = vpop.permute.xlu0 %895
        %v898 = vmul.f32 %v756, %v896
        %v899 = vmul.f32 %v759, %v896
        %v900 = vmul.f32 %v756, %v676
        %v901 = vmul.f32 %v759, %v676
        %904 = vrot.lane.b32.xlu0 %v900, 16
        %v905 = vpop.permute.xlu0 %904
        %906 = vrot.lane.b32.xlu0 %v901, 16
        %v907 = vpop.permute.xlu0 %906
        %v910 = vadd.f32 %v898, %v905
        %v911 = vadd.f32 %v899, %v907
        %v912 = vmul.f32 %v813, %v664
        %v913 = vmul.f32 %v816, %v664
        %v914 = vmul.f32 %v813, %v674
        %v915 = vmul.f32 %v816, %v674
        %918 = vrot.lane.b32.xlu0 %v914, 120
        %v919 = vpop.permute.xlu0 %918
        %920 = vrot.lane.b32.xlu0 %v915, 120
        %v921 = vpop.permute.xlu0 %920
        %v924 = vsub.f32 %v912, %v919
        %v925 = vsub.f32 %v913, %v921
        %v926 = vmul.f32 %v813, %v668
        %v927 = vmul.f32 %v816, %v668
        %v928 = vmul.f32 %v813, %v665
        %v929 = vmul.f32 %v816, %v665
        %932 = vrot.lane.b32.xlu0 %v928, 8
        %v933 = vpop.permute.xlu0 %932
        %934 = vrot.lane.b32.xlu0 %v929, 8
        %v935 = vpop.permute.xlu0 %934
        %v938 = vadd.f32 %v926, %v933
        %v939 = vadd.f32 %v927, %v935
        %v940 = vsel %vm670, %v924, %v938
        %v941 = vsel %vm670, %v925, %v939
        %v942 = vpack.c.bf16 %v940, %v940
        %v943 = vpack.c.bf16 %v941, %v941
        %v944 = vpack.c.bf16 %v870, %v870
        %v945 = vpack.c.bf16 %v873, %v873
        %947 = vrot.lane.b32.xlu0 %v910, 120
        %v948 = vpop.permute.xlu0 %947
        %v950 = vsel %vm670, %v892, %v948
        %v951 = vpack.c.bf16 %v950, %v950
        %vm952 = vcmask 130048
        %v954 = vsel %vm952, %v951, 0
        %v957 = vsel %vm952, %v942, 0
        %959 = vmatprep.subr.bf16.mxu0 0
        %960 = vmatpush1.bf16.xpose.msra.mxu0 %v957
        %961 = vmatprep.subr.bf16.mxu0 0
        %962 = vmatpush1.bf16.xpose.msra.mxu0 0
        %963 = vmatprep.subr.bf16.mxu0 0
        %964 = vmatpush1.bf16.xpose.msra.mxu0 0
        %965 = vmatprep.subr.bf16.mxu0 0
        %966 = vmatpush1.bf16.xpose.msra.mxu0 0
        %967 = vmatprep.subr.bf16.mxu0 0
        %968 = vmatpush1.bf16.xpose.msra.mxu0 0
        %969 = vmatprep.subr.bf16.mxu0 0
        %970 = vmatpush1.bf16.xpose.msra.mxu0 0
        %971 = vmatprep.subr.bf16.mxu0 0
        %972 = vmatpush1.bf16.xpose.msra.mxu0 0
        %973 = vmatprep.subr.bf16.mxu0 0
        %974 = vmatpush1.bf16.xpose.msra.mxu0 0
        %975 = vmatprep.subr.bf16.mxu0 0
        %976 = vmatpush1.bf16.xpose.msra.mxu0 0
        %977 = vmatprep.subr.bf16.mxu0 0
        %978 = vmatpush1.bf16.xpose.msra.mxu0 0
        %979 = vmatprep.subr.bf16.mxu0 0
        %980 = vmatpush1.bf16.xpose.msra.mxu0 0
        %981 = vmatprep.subr.bf16.mxu0 0
        %982 = vmatpush1.bf16.xpose.msra.mxu0 0
        %983 = vmatprep.subr.bf16.mxu0 0
        %984 = vmatpush1.bf16.xpose.msra.mxu0 0
        %985 = vmatprep.subr.bf16.mxu0 0
        %986 = vmatpush1.bf16.xpose.msra.mxu0 0
        %987 = vmatprep.subr.bf16.mxu0 0
        %988 = vmatpush1.bf16.xpose.msra.mxu0 0
        %989 = vmatprep.subr.bf16.mxu0 0
        %990 = vmatpush1.bf16.xpose.msra.mxu0 0
        %991 = vmatprep.mubr.bf16.mxu0 0
        %992 = vmatmul.mubr.bf16.gmra.mrb[0].mxu0 %v954
        %v993 = vpop.f32.mrb[0].mxu0
        %v994 = vadd.f32 0.0, %v993
        %v995 = vpop.f32.mrb[0].mxu0
        %v996 = vpop.f32.mrb[0].mxu0
        %v997 = vpop.f32.mrb[0].mxu0
        %998 = vdwg.mxu0
        %v999 = vsel %vm670, %v994, -inf
        %1000 = vmax.xlane.f32.xlu0 %v999
        %v1001 = vpop.xlane.xlu0 %1000
        %v1002 = vsub.f32 %v994, %v1001
        %v1003 = vmul.f32 %v1002, 1.442695
        %v1004 = vpow.pop %v1003
        %v1005 = vsel %vm670, %v1004, 0.0
        %1006 = vadd.xlane.f32.xlu0 %v1005
        %v1007 = vpop.xlane.xlu0 %1006
        %v1008 = vrcp.pop %v1007
        %v1009 = vmul.f32 %v1004, %v1008
        %v1010 = vpack.c.bf16 %v1009, %v1009
        %v1012 = vsel %vm670, %v1010, 0
        %vm1014 = vcmask 1043456
        %v1016 = vsel %vm1014, %v944, 0
        %1018 = vmatprep.subr.bf16.mxu0 0
        %1019 = vmatpush1.bf16.msra.mxu0 %v1016
        %1020 = vmatprep.subr.bf16.mxu0 0
        %1021 = vmatpush1.bf16.msra.mxu0 0
        %1022 = vmatprep.subr.bf16.mxu0 0
        %1023 = vmatpush1.bf16.msra.mxu0 0
        %1024 = vmatprep.subr.bf16.mxu0 0
        %1025 = vmatpush1.bf16.msra.mxu0 0
        %1026 = vmatprep.subr.bf16.mxu0 0
        %1027 = vmatpush1.bf16.msra.mxu0 0
        %1028 = vmatprep.subr.bf16.mxu0 0
        %1029 = vmatpush1.bf16.msra.mxu0 0
        %1030 = vmatprep.subr.bf16.mxu0 0
        %1031 = vmatpush1.bf16.msra.mxu0 0
        %1032 = vmatprep.subr.bf16.mxu0 0
        %1033 = vmatpush1.bf16.msra.mxu0 0
        %1034 = vmatprep.subr.bf16.mxu0 0
        %1035 = vmatpush1.bf16.msra.mxu0 0
        %1036 = vmatprep.subr.bf16.mxu0 0
        %1037 = vmatpush1.bf16.msra.mxu0 0
        %1038 = vmatprep.subr.bf16.mxu0 0
        %1039 = vmatpush1.bf16.msra.mxu0 0
        %1040 = vmatprep.subr.bf16.mxu0 0
        %1041 = vmatpush1.bf16.msra.mxu0 0
        %1042 = vmatprep.subr.bf16.mxu0 0
        %1043 = vmatpush1.bf16.msra.mxu0 0
        %1044 = vmatprep.subr.bf16.mxu0 0
        %1045 = vmatpush1.bf16.msra.mxu0 0
        %1046 = vmatprep.subr.bf16.mxu0 0
        %1047 = vmatpush1.bf16.msra.mxu0 0
        %1048 = vmatprep.subr.bf16.mxu0 0
        %1049 = vmatpush1.bf16.msra.mxu0 0
        %1050 = vmatprep.mubr.bf16.mxu0 0
        %1051 = vmatmul.mubr.bf16.gmra.mrb[0].mxu0 %v1012
        %v1052 = vpop.f32.mrb[0].mxu0
        %v1053 = vadd.f32 0.0, %v1052
        %v1054 = vpop.f32.mrb[0].mxu0
        %v1055 = vpop.f32.mrb[0].mxu0
        %v1056 = vpop.f32.mrb[0].mxu0
        %1057 = vdwg.mxu0
        %v1058 = vpack.c.bf16 %v1053, %v1053
        %vm1059 = vcmask 125952
        %1060 = vst.msk [vmem:[#allocation3] sm:$0xf] %vm1059, %v1058
        %1062 = vrot.lane.b32.xlu0 %v892, 120
        %v1063 = vpop.permute.xlu0 %1062
        %1065 = vrot.lane.b32.xlu0 %v910, 112
        %v1066 = vpop.permute.xlu0 %1065
        %v1068 = vsel %vm670, %v1063, %v1066
        %v1069 = vpack.c.bf16 %v1068, %v1068
        %v1071 = vsel %vm952, %v1069, 0
        %1073 = vmatprep.subr.bf16.mxu0 0
        %1074 = vmatpush1.bf16.xpose.msra.mxu0 %v957
        %1075 = vmatprep.subr.bf16.mxu0 0
        %1076 = vmatpush1.bf16.xpose.msra.mxu0 0
        %1077 = vmatprep.subr.bf16.mxu0 0
        %1078 = vmatpush1.bf16.xpose.msra.mxu0 0
        %1079 = vmatprep.subr.bf16.mxu0 0
        %1080 = vmatpush1.bf16.xpose.msra.mxu0 0
        %1081 = vmatprep.subr.bf16.mxu0 0
        %1082 = vmatpush1.bf16.xpose.msra.mxu0 0
        %1083 = vmatprep.subr.bf16.mxu0 0
        %1084 = vmatpush1.bf16.xpose.msra.mxu0 0
        %1085 = vmatprep.subr.bf16.mxu0 0
        %1086 = vmatpush1.bf16.xpose.msra.mxu0 0
        %1087 = vmatprep.subr.bf16.mxu0 0
        %1088 = vmatpush1.bf16.xpose.msra.mxu0 0
        %1089 = vmatprep.subr.bf16.mxu0 0
        %1090 = vmatpush1.bf16.xpose.msra.mxu0 0
        %1091 = vmatprep.subr.bf16.mxu0 0
        %1092 = vmatpush1.bf16.xpose.msra.mxu0 0
        %1093 = vmatprep.subr.bf16.mxu0 0
        %1094 = vmatpush1.bf16.xpose.msra.mxu0 0
        %1095 = vmatprep.subr.bf16.mxu0 0
        %1096 = vmatpush1.bf16.xpose.msra.mxu0 0
        %1097 = vmatprep.subr.bf16.mxu0 0
        %1098 = vmatpush1.bf16.xpose.msra.mxu0 0
        %1099 = vmatprep.subr.bf16.mxu0 0
        %1100 = vmatpush1.bf16.xpose.msra.mxu0 0
        %1101 = vmatprep.subr.bf16.mxu0 0
        %1102 = vmatpush1.bf16.xpose.msra.mxu0 0
        %1103 = vmatprep.subr.bf16.mxu0 0
        %1104 = vmatpush1.bf16.xpose.msra.mxu0 0
        %1105 = vmatprep.mubr.bf16.mxu0 0
        %1106 = vmatmul.mubr.bf16.gmra.mrb[0].mxu0 %v1071
        %v1107 = vpop.f32.mrb[0].mxu0
        %v1108 = vadd.f32 0.0, %v1107
        %v1109 = vpop.f32.mrb[0].mxu0
        %v1110 = vpop.f32.mrb[0].mxu0
        %v1111 = vpop.f32.mrb[0].mxu0
        %1112 = vdwg.mxu0
        %v1113 = vsel %vm670, %v1108, -inf
        %1114 = vmax.xlane.f32.xlu0 %v1113
        %v1115 = vpop.xlane.xlu0 %1114
        %v1116 = vsub.f32 %v1108, %v1115
        %v1117 = vmul.f32 %v1116, 1.442695
        %v1118 = vpow.pop %v1117
        %v1119 = vsel %vm670, %v1118, 0.0
        %1120 = vadd.xlane.f32.xlu0 %v1119
        %v1121 = vpop.xlane.xlu0 %1120
        %v1122 = vrcp.pop %v1121
        %v1123 = vmul.f32 %v1118, %v1122
        %v1124 = vpack.c.bf16 %v1123, %v1123
        %v1126 = vsel %vm670, %v1124, 0
        %1128 = vmatprep.subr.bf16.mxu0 0
        %1129 = vmatpush1.bf16.msra.mxu0 %v1016
        %1130 = vmatprep.subr.bf16.mxu0 0
        %1131 = vmatpush1.bf16.msra.mxu0 0
        %1132 = vmatprep.subr.bf16.mxu0 0
        %1133 = vmatpush1.bf16.msra.mxu0 0
        %1134 = vmatprep.subr.bf16.mxu0 0
        %1135 = vmatpush1.bf16.msra.mxu0 0
        %1136 = vmatprep.subr.bf16.mxu0 0
        %1137 = vmatpush1.bf16.msra.mxu0 0
        %1138 = vmatprep.subr.bf16.mxu0 0
        %1139 = vmatpush1.bf16.msra.mxu0 0
        %1140 = vmatprep.subr.bf16.mxu0 0
        %1141 = vmatpush1.bf16.msra.mxu0 0
        %1142 = vmatprep.subr.bf16.mxu0 0
        %1143 = vmatpush1.bf16.msra.mxu0 0
        %1144 = vmatprep.subr.bf16.mxu0 0
        %1145 = vmatpush1.bf16.msra.mxu0 0
        %1146 = vmatprep.subr.bf16.mxu0 0
        %1147 = vmatpush1.bf16.msra.mxu0 0
        %1148 = vmatprep.subr.bf16.mxu0 0
        %1149 = vmatpush1.bf16.msra.mxu0 0
        %1150 = vmatprep.subr.bf16.mxu0 0
        %1151 = vmatpush1.bf16.msra.mxu0 0
        %1152 = vmatprep.subr.bf16.mxu0 0
        %1153 = vmatpush1.bf16.msra.mxu0 0
        %1154 = vmatprep.subr.bf16.mxu0 0
        %1155 = vmatpush1.bf16.msra.mxu0 0
        %1156 = vmatprep.subr.bf16.mxu0 0
        %1157 = vmatpush1.bf16.msra.mxu0 0
        %1158 = vmatprep.subr.bf16.mxu0 0
        %1159 = vmatpush1.bf16.msra.mxu0 0
        %1160 = vmatprep.mubr.bf16.mxu0 0
        %1161 = vmatmul.mubr.bf16.gmra.mrb[0].mxu0 %v1126
        %v1162 = vpop.f32.mrb[0].mxu0
        %v1163 = vadd.f32 0.0, %v1162
        %v1164 = vpop.f32.mrb[0].mxu0
        %v1165 = vpop.f32.mrb[0].mxu0
        %v1166 = vpop.f32.mrb[0].mxu0
        %1167 = vdwg.mxu0
        %v1168 = vpack.c.bf16 %v1163, %v1163
        %1170 = vrot.lane.b32.xlu0 %v1168, 16
        %v1171 = vpop.permute.xlu0 %1170
        %vm1173 = vcmask 257152
        %1174 = vst.msk [vmem:[#allocation3] sm:$0xf] %vm1173, %v1171
        %1176 = vrot.lane.b32.xlu0 %v911, 120
        %v1177 = vpop.permute.xlu0 %1176
        %v1179 = vsel %vm670, %v893, %v1177
        %v1180 = vpack.c.bf16 %v1179, %v1179
        %v1182 = vsel %vm952, %v1180, 0
        %v1185 = vsel %vm952, %v943, 0
        %1187 = vmatprep.subr.bf16.mxu0 0
        %1188 = vmatpush1.bf16.xpose.msra.mxu0 %v1185
        %1189 = vmatprep.subr.bf16.mxu0 0
        %1190 = vmatpush1.bf16.xpose.msra.mxu0 0
        %1191 = vmatprep.subr.bf16.mxu0 0
        %1192 = vmatpush1.bf16.xpose.msra.mxu0 0
        %1193 = vmatprep.subr.bf16.mxu0 0
        %1194 = vmatpush1.bf16.xpose.msra.mxu0 0
        %1195 = vmatprep.subr.bf16.mxu0 0
        %1196 = vmatpush1.bf16.xpose.msra.mxu0 0
        %1197 = vmatprep.subr.bf16.mxu0 0
        %1198 = vmatpush1.bf16.xpose.msra.mxu0 0
        %1199 = vmatprep.subr.bf16.mxu0 0
        %1200 = vmatpush1.bf16.xpose.msra.mxu0 0
        %1201 = vmatprep.subr.bf16.mxu0 0
        %1202 = vmatpush1.bf16.xpose.msra.mxu0 0
        %1203 = vmatprep.subr.bf16.mxu0 0
        %1204 = vmatpush1.bf16.xpose.msra.mxu0 0
        %1205 = vmatprep.subr.bf16.mxu0 0
        %1206 = vmatpush1.bf16.xpose.msra.mxu0 0
        %1207 = vmatprep.subr.bf16.mxu0 0
        %1208 = vmatpush1.bf16.xpose.msra.mxu0 0
        %1209 = vmatprep.subr.bf16.mxu0 0
        %1210 = vmatpush1.bf16.xpose.msra.mxu0 0
        %1211 = vmatprep.subr.bf16.mxu0 0
        %1212 = vmatpush1.bf16.xpose.msra.mxu0 0
        %1213 = vmatprep.subr.bf16.mxu0 0
        %1214 = vmatpush1.bf16.xpose.msra.mxu0 0
        %1215 = vmatprep.subr.bf16.mxu0 0
        %1216 = vmatpush1.bf16.xpose.msra.mxu0 0
        %1217 = vmatprep.subr.bf16.mxu0 0
        %1218 = vmatpush1.bf16.xpose.msra.mxu0 0
        %1219 = vmatprep.mubr.bf16.mxu0 0
        %1220 = vmatmul.mubr.bf16.gmra.mrb[0].mxu0 %v1182
        %v1221 = vpop.f32.mrb[0].mxu0
        %v1222 = vadd.f32 0.0, %v1221
        %v1223 = vpop.f32.mrb[0].mxu0
        %v1224 = vpop.f32.mrb[0].mxu0
        %v1225 = vpop.f32.mrb[0].mxu0
        %1226 = vdwg.mxu0
        %v1227 = vsel %vm670, %v1222, -inf
        %1228 = vmax.xlane.f32.xlu0 %v1227
        %v1229 = vpop.xlane.xlu0 %1228
        %v1230 = vsub.f32 %v1222, %v1229
        %v1231 = vmul.f32 %v1230, 1.442695
        %v1232 = vpow.pop %v1231
        %v1233 = vsel %vm670, %v1232, 0.0
        %1234 = vadd.xlane.f32.xlu0 %v1233
        %v1235 = vpop.xlane.xlu0 %1234
        %v1236 = vrcp.pop %v1235
        %v1237 = vmul.f32 %v1232, %v1236
        %v1238 = vpack.c.bf16 %v1237, %v1237
        %v1240 = vsel %vm670, %v1238, 0
        %v1243 = vsel %vm1014, %v945, 0
        %1245 = vmatprep.subr.bf16.mxu0 0
        %1246 = vmatpush1.bf16.msra.mxu0 %v1243
        %1247 = vmatprep.subr.bf16.mxu0 0
        %1248 = vmatpush1.bf16.msra.mxu0 0
        %1249 = vmatprep.subr.bf16.mxu0 0
        %1250 = vmatpush1.bf16.msra.mxu0 0
        %1251 = vmatprep.subr.bf16.mxu0 0
        %1252 = vmatpush1.bf16.msra.mxu0 0
        %1253 = vmatprep.subr.bf16.mxu0 0
        %1254 = vmatpush1.bf16.msra.mxu0 0
        %1255 = vmatprep.subr.bf16.mxu0 0
        %1256 = vmatpush1.bf16.msra.mxu0 0
        %1257 = vmatprep.subr.bf16.mxu0 0
        %1258 = vmatpush1.bf16.msra.mxu0 0
        %1259 = vmatprep.subr.bf16.mxu0 0
        %1260 = vmatpush1.bf16.msra.mxu0 0
        %1261 = vmatprep.subr.bf16.mxu0 0
        %1262 = vmatpush1.bf16.msra.mxu0 0
        %1263 = vmatprep.subr.bf16.mxu0 0
        %1264 = vmatpush1.bf16.msra.mxu0 0
        %1265 = vmatprep.subr.bf16.mxu0 0
        %1266 = vmatpush1.bf16.msra.mxu0 0
        %1267 = vmatprep.subr.bf16.mxu0 0
        %1268 = vmatpush1.bf16.msra.mxu0 0
        %1269 = vmatprep.subr.bf16.mxu0 0
        %1270 = vmatpush1.bf16.msra.mxu0 0
        %1271 = vmatprep.subr.bf16.mxu0 0
        %1272 = vmatpush1.bf16.msra.mxu0 0
        %1273 = vmatprep.subr.bf16.mxu0 0
        %1274 = vmatpush1.bf16.msra.mxu0 0
        %1275 = vmatprep.subr.bf16.mxu0 0
        %1276 = vmatpush1.bf16.msra.mxu0 0
        %1277 = vmatprep.mubr.bf16.mxu0 0
        %1278 = vmatmul.mubr.bf16.gmra.mrb[0].mxu0 %v1240
        %v1279 = vpop.f32.mrb[0].mxu0
        %v1280 = vadd.f32 0.0, %v1279
        %v1281 = vpop.f32.mrb[0].mxu0
        %v1282 = vpop.f32.mrb[0].mxu0
        %v1283 = vpop.f32.mrb[0].mxu0
        %1284 = vdwg.mxu0
        %v1285 = vpack.c.bf16 %v1280, %v1280
        %v1287 = vrot.slane %v1285, 4
        %vm1289 = vcmask 130052
        %1290 = vst.msk [vmem:[#allocation3] sm:$0xf0] %vm1289, %v1287
        %1292 = vrot.lane.b32.xlu0 %v893, 120
        %v1293 = vpop.permute.xlu0 %1292
        %1295 = vrot.lane.b32.xlu0 %v911, 112
        %v1296 = vpop.permute.xlu0 %1295
        %v1298 = vsel %vm670, %v1293, %v1296
        %v1299 = vpack.c.bf16 %v1298, %v1298
        %v1301 = vsel %vm952, %v1299, 0
        %1303 = vmatprep.subr.bf16.mxu0 0
        %1304 = vmatpush1.bf16.xpose.msra.mxu0 %v1185
        %1305 = vmatprep.subr.bf16.mxu0 0
        %1306 = vmatpush1.bf16.xpose.msra.mxu0 0
        %1307 = vmatprep.subr.bf16.mxu0 0
        %1308 = vmatpush1.bf16.xpose.msra.mxu0 0
        %1309 = vmatprep.subr.bf16.mxu0 0
        %1310 = vmatpush1.bf16.xpose.msra.mxu0 0
        %1311 = vmatprep.subr.bf16.mxu0 0
        %1312 = vmatpush1.bf16.xpose.msra.mxu0 0
        %1313 = vmatprep.subr.bf16.mxu0 0
        %1314 = vmatpush1.bf16.xpose.msra.mxu0 0
        %1315 = vmatprep.subr.bf16.mxu0 0
        %1316 = vmatpush1.bf16.xpose.msra.mxu0 0
        %1317 = vmatprep.subr.bf16.mxu0 0
        %1318 = vmatpush1.bf16.xpose.msra.mxu0 0
        %1319 = vmatprep.subr.bf16.mxu0 0
        %1320 = vmatpush1.bf16.xpose.msra.mxu0 0
        %1321 = vmatprep.subr.bf16.mxu0 0
        %1322 = vmatpush1.bf16.xpose.msra.mxu0 0
        %1323 = vmatprep.subr.bf16.mxu0 0
        %1324 = vmatpush1.bf16.xpose.msra.mxu0 0
        %1325 = vmatprep.subr.bf16.mxu0 0
        %1326 = vmatpush1.bf16.xpose.msra.mxu0 0
        %1327 = vmatprep.subr.bf16.mxu0 0
        %1328 = vmatpush1.bf16.xpose.msra.mxu0 0
        %1329 = vmatprep.subr.bf16.mxu0 0
        %1330 = vmatpush1.bf16.xpose.msra.mxu0 0
        %1331 = vmatprep.subr.bf16.mxu0 0
        %1332 = vmatpush1.bf16.xpose.msra.mxu0 0
        %1333 = vmatprep.subr.bf16.mxu0 0
        %1334 = vmatpush1.bf16.xpose.msra.mxu0 0
        %1335 = vmatprep.mubr.bf16.mxu0 0
        %1336 = vmatmul.mubr.bf16.gmra.mrb[0].mxu0 %v1301
        %v1337 = vpop.f32.mrb[0].mxu0
        %v1338 = vadd.f32 0.0, %v1337
        %v1339 = vpop.f32.mrb[0].mxu0
        %v1340 = vpop.f32.mrb[0].mxu0
        %v1341 = vpop.f32.mrb[0].mxu0
        %1342 = vdwg.mxu0
        %v1343 = vsel %vm670, %v1338, -inf
        %1344 = vmax.xlane.f32.xlu0 %v1343
        %v1345 = vpop.xlane.xlu0 %1344
        %v1346 = vsub.f32 %v1338, %v1345
        %v1347 = vmul.f32 %v1346, 1.442695
        %v1348 = vpow.pop %v1347
        %v1349 = vsel %vm670, %v1348, 0.0
        %1350 = vadd.xlane.f32.xlu0 %v1349
        %v1351 = vpop.xlane.xlu0 %1350
        %v1352 = vrcp.pop %v1351
        %v1353 = vmul.f32 %v1348, %v1352
        %v1354 = vpack.c.bf16 %v1353, %v1353
        %v1356 = vsel %vm670, %v1354, 0
        %1358 = vmatprep.subr.bf16.mxu0 0
        %1359 = vmatpush1.bf16.msra.mxu0 %v1243
        %1360 = vmatprep.subr.bf16.mxu0 0
        %1361 = vmatpush1.bf16.msra.mxu0 0
        %1362 = vmatprep.subr.bf16.mxu0 0
        %1363 = vmatpush1.bf16.msra.mxu0 0
        %1364 = vmatprep.subr.bf16.mxu0 0
        %1365 = vmatpush1.bf16.msra.mxu0 0
        %1366 = vmatprep.subr.bf16.mxu0 0
        %1367 = vmatpush1.bf16.msra.mxu0 0
        %1368 = vmatprep.subr.bf16.mxu0 0
        %1369 = vmatpush1.bf16.msra.mxu0 0
        %1370 = vmatprep.subr.bf16.mxu0 0
        %1371 = vmatpush1.bf16.msra.mxu0 0
        %1372 = vmatprep.subr.bf16.mxu0 0
        %1373 = vmatpush1.bf16.msra.mxu0 0
        %1374 = vmatprep.subr.bf16.mxu0 0
        %1375 = vmatpush1.bf16.msra.mxu0 0
        %1376 = vmatprep.subr.bf16.mxu0 0
        %1377 = vmatpush1.bf16.msra.mxu0 0
        %1378 = vmatprep.subr.bf16.mxu0 0
        %1379 = vmatpush1.bf16.msra.mxu0 0
        %1380 = vmatprep.subr.bf16.mxu0 0
        %1381 = vmatpush1.bf16.msra.mxu0 0
        %1382 = vmatprep.subr.bf16.mxu0 0
        %1383 = vmatpush1.bf16.msra.mxu0 0
        %1384 = vmatprep.subr.bf16.mxu0 0
        %1385 = vmatpush1.bf16.msra.mxu0 0
        %1386 = vmatprep.subr.bf16.mxu0 0
        %1387 = vmatpush1.bf16.msra.mxu0 0
        %1388 = vmatprep.subr.bf16.mxu0 0
        %1389 = vmatpush1.bf16.msra.mxu0 0
        %1390 = vmatprep.mubr.bf16.mxu0 0
        %1391 = vmatmul.mubr.bf16.gmra.mrb[0].mxu0 %v1356
        %v1392 = vpop.f32.mrb[0].mxu0
        %v1393 = vadd.f32 0.0, %v1392
        %v1394 = vpop.f32.mrb[0].mxu0
        %v1395 = vpop.f32.mrb[0].mxu0
        %v1396 = vpop.f32.mrb[0].mxu0
        %1397 = vdwg.mxu0
        %v1398 = vpack.c.bf16 %v1393, %v1393
        %v1400 = vrot.slane %v1398, 4
        %1401 = vrot.lane.b32.xlu0 %v1400, 16
        %v1402 = vpop.permute.xlu0 %1401
        %vm1404 = vcmask 261252
        %1405 = vst.msk [vmem:[#allocation3] sm:$0xf0] %vm1404, %v1402
        %v1406 = vld [vmem:[#allocation3] sm:$0xff]
        %v1407 = vld [vmem:[%s631] sm:$0xf]
        %v1408 = vld [vmem:[%s631 + $0x4] sm:$0xf]
        %v1409 = vld [vmem:[%s631 + $0x8] sm:$0xf]
        %v1410 = vld [vmem:[%s631 + $0xc] sm:$0xf]
        %v1415 = vunpack.c.l.b16 %v1407
        %v1416 = vunpack.c.l.b16 %v1408
        %v1417 = vunpack.c.l.b16 %v1409
        %v1418 = vunpack.c.l.b16 %v1410
        %v1419 = vpack.c.b16 %v1416, %v1415
        %v1420 = vpack.c.b16 %v1418, %v1417
        %v1424 = vsel %vm680, %v1406, 0
        %1426 = vmatprep.subr.bf16.mxu0 0
        %1427 = vmatpush1.bf16.msra.mxu0 %v1419
        %1428 = vmatprep.subr.bf16.mxu0 0
        %1429 = vmatpush1.bf16.msra.mxu0 %v1420
        %1430 = vmatprep.subr.bf16.mxu0 0
        %1431 = vmatpush1.bf16.msra.mxu0 0
        %1432 = vmatprep.subr.bf16.mxu0 0
        %1433 = vmatpush1.bf16.msra.mxu0 0
        %1434 = vmatprep.subr.bf16.mxu0 0
        %1435 = vmatpush1.bf16.msra.mxu0 0
        %1436 = vmatprep.subr.bf16.mxu0 0
        %1437 = vmatpush1.bf16.msra.mxu0 0
        %1438 = vmatprep.subr.bf16.mxu0 0
        %1439 = vmatpush1.bf16.msra.mxu0 0
        %1440 = vmatprep.subr.bf16.mxu0 0
        %1441 = vmatpush1.bf16.msra.mxu0 0
        %1442 = vmatprep.subr.bf16.mxu0 0
        %1443 = vmatpush1.bf16.msra.mxu0 0
        %1444 = vmatprep.subr.bf16.mxu0 0
        %1445 = vmatpush1.bf16.msra.mxu0 0
        %1446 = vmatprep.subr.bf16.mxu0 0
        %1447 = vmatpush1.bf16.msra.mxu0 0
        %1448 = vmatprep.subr.bf16.mxu0 0
        %1449 = vmatpush1.bf16.msra.mxu0 0
        %1450 = vmatprep.subr.bf16.mxu0 0
        %1451 = vmatpush1.bf16.msra.mxu0 0
        %1452 = vmatprep.subr.bf16.mxu0 0
        %1453 = vmatpush1.bf16.msra.mxu0 0
        %1454 = vmatprep.subr.bf16.mxu0 0
        %1455 = vmatpush1.bf16.msra.mxu0 0
        %1456 = vmatprep.subr.bf16.mxu0 0
        %1457 = vmatpush1.bf16.msra.mxu0 0
        %1458 = vmatprep.mubr.bf16.mxu0 0
        %1459 = vmatmul.mubr.bf16.gmra.mrb[0].mxu0 %v1424
        %v1460 = vpop.f32.mrb[0].mxu0
        %v1461 = vadd.f32 0.0, %v1460
        %v1462 = vpop.f32.mrb[0].mxu0
        %v1463 = vpop.f32.mrb[0].mxu0
        %v1464 = vadd.f32 0.0, %v1463
        %v1465 = vpop.f32.mrb[0].mxu0
        %1466 = vdwg.mxu0
        %v1467 = vadd.f32 %v662, %v1461
        %v1468 = vadd.f32 %v663, %v1464
        %v1469 = vld [vmem:[%s634] sm:$0x1]
        %v1470 = vmul.f32 %v1467, %v1467
        %v1471 = vmul.f32 %v1468, %v1468
        %v1472 = vsel %vm680, %v1470, 0.0
        %1473 = vadd.xlane.f32.xlu0 %v1472
        %v1474 = vpop.xlane.xlu0 %1473
        %v1475 = vsel %vm680, %v1471, 0.0
        %1476 = vadd.xlane.f32.xlu0 %v1475
        %v1477 = vpop.xlane.xlu0 %1476
        %v1478 = vmax.f32 %v1474, 1e-24
        %v1479 = vmax.f32 %v1477, 1e-24
        %v1480 = vrsqrt.pop %v1478
        %v1481 = vrsqrt.pop %v1479
        %v1482 = vmul.f32 %v1467, %v1480
        %v1483 = vmul.f32 %v1468, %v1481
        %v1485 = vlaneseq
        %v1486 = vshrl.u32 %v1485, 7
        %v1487 = vsub.s32 0, %v1486
        %v1488 = vrot.slane %v1469, %v1487
        %v1490 = vmul.f32 %v1482, %v1488
        %v1491 = vmul.f32 %v1483, %v1488
        %v1492 = vpack.c.bf16 %v1491, %v1490
        %v1493 = vld [vmem:[%s639] sm:$0xf]
        %v1494 = vld [vmem:[%s639 + $0x4] sm:$0xf]
        %v1495 = vld [vmem:[%s639 + $0x8] sm:$0xf]
        %v1496 = vld [vmem:[%s639 + $0xc] sm:$0xf]
        %v1497 = vld [vmem:[%s642] sm:$0x1]
        %v1499 = vlaneseq
        %v1500 = vshrl.u32 %v1499, 7
        %v1501 = vsub.s32 0, %v1500
        %v1502 = vrot.slane %v1497, %v1501
        %v1508 = vunpack.c.l.b16 %v1493
        %v1509 = vunpack.c.l.b16 %v1494
        %v1510 = vunpack.c.l.b16 %v1495
        %v1511 = vunpack.c.l.b16 %v1496
        %v1512 = vpack.c.b16 %v1509, %v1508
        %v1513 = vpack.c.b16 %v1511, %v1510
        %v1517 = vsel %vm680, %v1492, 0
        %1519 = vmatprep.subr.bf16.mxu0 0
        %1520 = vmatpush1.bf16.msra.mxu0 %v1512
        %1521 = vmatprep.subr.bf16.mxu0 0
        %1522 = vmatpush1.bf16.msra.mxu0 %v1513
        %1523 = vmatprep.subr.bf16.mxu0 0
        %1524 = vmatpush1.bf16.msra.mxu0 0
        %1525 = vmatprep.subr.bf16.mxu0 0
        %1526 = vmatpush1.bf16.msra.mxu0 0
        %1527 = vmatprep.subr.bf16.mxu0 0
        %1528 = vmatpush1.bf16.msra.mxu0 0
        %1529 = vmatprep.subr.bf16.mxu0 0
        %1530 = vmatpush1.bf16.msra.mxu0 0
        %1531 = vmatprep.subr.bf16.mxu0 0
        %1532 = vmatpush1.bf16.msra.mxu0 0
        %1533 = vmatprep.subr.bf16.mxu0 0
        %1534 = vmatpush1.bf16.msra.mxu0 0
        %1535 = vmatprep.subr.bf16.mxu0 0
        %1536 = vmatpush1.bf16.msra.mxu0 0
        %1537 = vmatprep.subr.bf16.mxu0 0
        %1538 = vmatpush1.bf16.msra.mxu0 0
        %1539 = vmatprep.subr.bf16.mxu0 0
        %1540 = vmatpush1.bf16.msra.mxu0 0
        %1541 = vmatprep.subr.bf16.mxu0 0
        %1542 = vmatpush1.bf16.msra.mxu0 0
        %1543 = vmatprep.subr.bf16.mxu0 0
        %1544 = vmatpush1.bf16.msra.mxu0 0
        %1545 = vmatprep.subr.bf16.mxu0 0
        %1546 = vmatpush1.bf16.msra.mxu0 0
        %1547 = vmatprep.subr.bf16.mxu0 0
        %1548 = vmatpush1.bf16.msra.mxu0 0
        %1549 = vmatprep.subr.bf16.mxu0 0
        %1550 = vmatpush1.bf16.msra.mxu0 0
        %1551 = vmatprep.mubr.bf16.mxu0 0
        %1552 = vmatmul.mubr.bf16.gmra.mrb[0].mxu0 %v1517
        %v1553 = vpop.f32.mrb[0].mxu0
        %v1554 = vadd.f32 %v1502, %v1553
        %v1555 = vpop.f32.mrb[0].mxu0
        %v1556 = vpop.f32.mrb[0].mxu0
        %v1557 = vadd.f32 %v1502, %v1556
        %v1558 = vpop.f32.mrb[0].mxu0
        %1559 = vdwg.mxu0
        %v1560 = vmul.f32 %v1554, 0.5
        %v1561 = vmul.f32 %v1557, 0.5
        %v1562 = vmul.f32 %v1554, 0.70710677
        %v1563 = vmul.f32 %v1557, 0.70710677
        %vm1564 = vcmp.ge.f32.partialorder %v1562, 0.0
        %vm1565 = vcmp.ge.f32.partialorder %v1563, 0.0
        %v1566 = vsel %vm1564, 1.0, -1.0
        %v1567 = vsel %vm1565, 1.0, -1.0
        %v1568 = vand.u32 2147483647, %v1562
        %v1569 = vand.u32 2147483647, %v1563
        %v1570 = vmul.f32 %v1568, 0.3275911
        %v1571 = vmul.f32 %v1569, 0.3275911
        %v1572 = vadd.f32 %v1570, 1.0
        %v1573 = vadd.f32 %v1571, 1.0
        %v1574 = vrcp.pop %v1572
        %v1575 = vmul.f32 1.0, %v1574
        %v1576 = vrcp.pop %v1573
        %v1577 = vmul.f32 1.0, %v1576
        %v1578 = vmul.f32 %v1575, 1.0614054
        %v1579 = vmul.f32 %v1577, 1.0614054
        %v1580 = vadd.f32 %v1578, -1.4531521
        %v1581 = vadd.f32 %v1579, -1.4531521
        %v1582 = vmul.f32 %v1580, %v1575
        %v1583 = vmul.f32 %v1581, %v1577
        %v1584 = vadd.f32 %v1582, 1.4214138
        %v1585 = vadd.f32 %v1583, 1.4214138
        %v1586 = vmul.f32 %v1584, %v1575
        %v1587 = vmul.f32 %v1585, %v1577
        %v1588 = vadd.f32 %v1586, -0.28449672
        %v1589 = vadd.f32 %v1587, -0.28449672
        %v1590 = vmul.f32 %v1588, %v1575
        %v1591 = vmul.f32 %v1589, %v1577
        %v1592 = vadd.f32 %v1590, 0.2548296
        %v1593 = vadd.f32 %v1591, 0.2548296
        %v1594 = vmul.f32 %v1592, %v1575
        %v1595 = vmul.f32 %v1593, %v1577
        %v1596 = vsub.f32 0.0, %v1568
        %v1597 = vsub.f32 0.0, %v1569
        %v1598 = vmul.f32 %v1596, %v1568
        %v1599 = vmul.f32 %v1597, %v1569
        %v1600 = vmul.f32 %v1598, 1.442695
        %v1601 = vpow.pop %v1600
        %v1602 = vmul.f32 %v1599, 1.442695
        %v1603 = vpow.pop %v1602
        %v1604 = vmul.f32 %v1594, %v1601
        %v1605 = vmul.f32 %v1595, %v1603
        %v1606 = vsub.f32 1.0, %v1604
        %v1607 = vsub.f32 1.0, %v1605
        %v1608 = vmul.f32 %v1566, %v1606
        %v1609 = vmul.f32 %v1567, %v1607
        %v1610 = vadd.f32 %v1608, 1.0
        %v1611 = vadd.f32 %v1609, 1.0
        %v1612 = vmul.f32 %v1560, %v1610
        %v1613 = vmul.f32 %v1561, %v1611
        %v1614 = vpack.c.bf16 %v1613, %v1612
        %v1615 = vld [vmem:[%s647] sm:$0xf]
        %v1616 = vld [vmem:[%s647 + $0x4] sm:$0xf]
        %v1617 = vld [vmem:[%s647 + $0x8] sm:$0xf]
        %v1618 = vld [vmem:[%s647 + $0xc] sm:$0xf]
        %v1619 = vld [vmem:[%s647 + $0x10] sm:$0xf]
        %v1620 = vld [vmem:[%s647 + $0x14] sm:$0xf]
        %v1621 = vld [vmem:[%s647 + $0x18] sm:$0xf]
        %v1622 = vld [vmem:[%s647 + $0x1c] sm:$0xf]
        %v1623 = vld [vmem:[%s647 + $0x20] sm:$0xf]
        %v1624 = vld [vmem:[%s647 + $0x24] sm:$0xf]
        %v1625 = vld [vmem:[%s647 + $0x28] sm:$0xf]
        %v1626 = vld [vmem:[%s647 + $0x2c] sm:$0xf]
        %v1627 = vld [vmem:[%s647 + $0x30] sm:$0xf]
        %v1628 = vld [vmem:[%s647 + $0x34] sm:$0xf]
        %v1629 = vld [vmem:[%s647 + $0x38] sm:$0xf]
        %v1630 = vld [vmem:[%s647 + $0x3c] sm:$0xf]
        %v1631 = vld [vmem:[%s650] sm:$0x1]
        %v1633 = vlaneseq
        %v1634 = vshrl.u32 %v1633, 7
        %v1635 = vsub.s32 0, %v1634
        %v1636 = vrot.slane %v1631, %v1635
        %v1654 = vunpack.c.l.b16 %v1615
        %v1655 = vunpack.c.l.b16 %v1616
        %v1656 = vunpack.c.l.b16 %v1617
        %v1657 = vunpack.c.l.b16 %v1618
        %v1658 = vunpack.c.l.b16 %v1619
        %v1659 = vunpack.c.l.b16 %v1620
        %v1660 = vunpack.c.l.b16 %v1621
        %v1661 = vunpack.c.l.b16 %v1622
        %v1662 = vunpack.c.l.b16 %v1623
        %v1663 = vunpack.c.l.b16 %v1624
        %v1664 = vunpack.c.l.b16 %v1625
        %v1665 = vunpack.c.l.b16 %v1626
        %v1666 = vunpack.c.l.b16 %v1627
        %v1667 = vunpack.c.l.b16 %v1628
        %v1668 = vunpack.c.l.b16 %v1629
        %v1669 = vunpack.c.l.b16 %v1630
        %v1670 = vpack.c.b16 %v1655, %v1654
        %v1671 = vpack.c.b16 %v1657, %v1656
        %v1672 = vpack.c.b16 %v1659, %v1658
        %v1673 = vpack.c.b16 %v1661, %v1660
        %v1674 = vpack.c.b16 %v1663, %v1662
        %v1675 = vpack.c.b16 %v1665, %v1664
        %v1676 = vpack.c.b16 %v1667, %v1666
        %v1677 = vpack.c.b16 %v1669, %v1668
        %1686 = vmatprep.subr.bf16.mxu0 0
        %1687 = vmatpush1.bf16.msra.mxu0 %v1670
        %1688 = vmatprep.subr.bf16.mxu0 0
        %1689 = vmatpush1.bf16.msra.mxu0 %v1671
        %1690 = vmatprep.subr.bf16.mxu0 0
        %1691 = vmatpush1.bf16.msra.mxu0 %v1672
        %1692 = vmatprep.subr.bf16.mxu0 0
        %1693 = vmatpush1.bf16.msra.mxu0 %v1673
        %1694 = vmatprep.subr.bf16.mxu0 0
        %1695 = vmatpush1.bf16.msra.mxu0 %v1674
        %1696 = vmatprep.subr.bf16.mxu0 0
        %1697 = vmatpush1.bf16.msra.mxu0 %v1675
        %1698 = vmatprep.subr.bf16.mxu0 0
        %1699 = vmatpush1.bf16.msra.mxu0 %v1676
        %1700 = vmatprep.subr.bf16.mxu0 0
        %1701 = vmatpush1.bf16.msra.mxu0 %v1677
        %1702 = vmatprep.subr.bf16.mxu0 0
        %1703 = vmatpush1.bf16.msra.mxu0 0
        %1704 = vmatprep.subr.bf16.mxu0 0
        %1705 = vmatpush1.bf16.msra.mxu0 0
        %1706 = vmatprep.subr.bf16.mxu0 0
        %1707 = vmatpush1.bf16.msra.mxu0 0
        %1708 = vmatprep.subr.bf16.mxu0 0
        %1709 = vmatpush1.bf16.msra.mxu0 0
        %1710 = vmatprep.subr.bf16.mxu0 0
        %1711 = vmatpush1.bf16.msra.mxu0 0
        %1712 = vmatprep.subr.bf16.mxu0 0
        %1713 = vmatpush1.bf16.msra.mxu0 0
        %1714 = vmatprep.subr.bf16.mxu0 0
        %1715 = vmatpush1.bf16.msra.mxu0 0
        %1716 = vmatprep.subr.bf16.mxu0 0
        %1717 = vmatpush1.bf16.msra.mxu0 0
        %1718 = vmatprep.mubr.bf16.mxu0 0
        %1719 = vmatmul.mubr.bf16.gmra.mrb[0].mxu0 %v1614
        %v1720 = vpop.f32.mrb[0].mxu0
        %v1721 = vadd.f32 %v1636, %v1720
        %v1722 = vpop.f32.mrb[0].mxu0
        %v1723 = vpop.f32.mrb[0].mxu0
        %v1724 = vadd.f32 %v1636, %v1723
        %v1725 = vpop.f32.mrb[0].mxu0
        %1726 = vdwg.mxu0
        %v1727 = vadd.f32 %v1467, %v1721
        %v1728 = vadd.f32 %v1468, %v1724
        %1729 = vst.msk [vmem:[#allocation2] sm:$0xff] %vm680, %v1727
        %1730 = vst.msk [vmem:[#allocation2 + $0x8] sm:$0xff] %vm680, %v1728
        %p1731 = scmp.eq.s32.totalorder %s32, 1
        // Predicated region
        $region85: #{tpu_custom_call.1} parent=75 // pred_check
          %p1732 = pneg %p1731
        $region86: #{tpu_custom_call.1} parent=75 // pred_check_branch
          %1734 = sbr.rel (%p1732) target = $region88
        $region87: #{tpu_custom_call.1} parent=75 // pred_region
          %v1735 = vld [vmem:[%s13] sm:$0x1]
          %v1736 = vmul.f32 %v1727, %v1727
          %v1737 = vmul.f32 %v1728, %v1728
          %v1738 = vsel %vm680, %v1736, 0.0
          %1739 = vadd.xlane.f32.xlu0 %v1738
          %v1740 = vpop.xlane.xlu0 %1739
          %v1741 = vsel %vm680, %v1737, 0.0
          %1742 = vadd.xlane.f32.xlu0 %v1741
          %v1743 = vpop.xlane.xlu0 %1742
          %v1744 = vmax.f32 %v1740, 1e-24
          %v1745 = vmax.f32 %v1743, 1e-24
          %v1746 = vrsqrt.pop %v1744
          %v1747 = vrsqrt.pop %v1745
          %v1748 = vmul.f32 %v1727, %v1746
          %v1749 = vmul.f32 %v1728, %v1747
          %v1751 = vlaneseq
          %v1752 = vshrl.u32 %v1751, 7
          %v1753 = vsub.s32 0, %v1752
          %v1754 = vrot.slane %v1735, %v1753
          %v1756 = vmul.f32 %v1748, %v1754
          %v1757 = vmul.f32 %v1749, %v1754
          %1758 = vst.msk [vmem:[#allocation7] sm:$0xff] %vm680, %v1756
          %1759 = vst.msk [vmem:[#allocation7 + $0x8] sm:$0xff] %vm680, %v1757
        $region88: #{tpu_custom_call.1} parent=75 // pred_fallthru
          _
        // Predicated region
        $region89: #{tpu_custom_call.1} parent=75 // pred_check
          %p1760 = pneg %p406
        $region90: #{tpu_custom_call.1} parent=75 // pred_check_branch
          %1762 = sbr.rel (%p1760) target = $region92
        $region91: #{tpu_custom_call.1} parent=75 // pred_region
          %s1763 = smul.u32 2, %s31
          %s1765 = ssub.s32 256, 256
          %1766 = vsyncadd [#allocation6], %s1765
          %s1767 = smul.addr %s1763, 128
          %s1768 = scalar_lea.hbm %s14, %s1767
          %s1769 = sshll.u32 [#allocation7], 4
          %s1770 = int_to_ptr.vmem [resolvable:$true] %s1769
          %1775 = dma.vmem_to_hbm [thread:$0]  %s1770, 256, %s1768, [#allocation6], 128, 128, 8
        $region92: #{tpu_custom_call.1} parent=75 // pred_fallthru
          _
        // Predicated region
        $region93: #{tpu_custom_call.1} parent=75 // pred_check
          %p1776 = pneg %p406
        $region94: #{tpu_custom_call.1} parent=75 // pred_check_branch
          %1778 = sbr.rel (%p1776) target = $region96
        $region95: #{tpu_custom_call.1} parent=75 // pred_region
          %1779 = dma.done [#allocation6], 256
        $region96: #{tpu_custom_call.1} parent=75 // pred_fallthru
          _
      $region76: #{tpu_custom_call.1} parent=5 // pred_fallthru
        _
      %p1780 = scmp.le.s32.totalorder 2, %s22
      // Predicated region
      $region97: #{tpu_custom_call.1} parent=5 // pred_check
        %p1781 = pneg %p1780
      $region98: #{tpu_custom_call.1} parent=5 // pred_check_branch
        %1783 = sbr.rel (%p1781) target = $region100
      $region99: #{tpu_custom_call.1} parent=5 // pred_region
        %s1784 = ssub.s32 %s22, 2
      $region100: #{tpu_custom_call.1} parent=5 // pred_fallthru
        _
    $region6: #{tpu_custom_call.1} parent=1 // loop_footer
      %s26 = sadd.s32 1, %s22
    $region7: #{tpu_custom_call.1} parent=1 // loop_footer_branch
      %21 = sbr.rel target = $region3
    $region8: #{tpu_custom_call.1} parent=1 // loop_exit
      _
    %1785 = vsyncpa [#allocation5], 1
    %s1786 = scalar_lea.sflag [#allocation5], 1
    %1787 = vsyncpa %s1786, 1
    %1788 = vsyncpa [#allocation6], 1
    %s1789 = scalar_lea.sflag [#allocation6], 1
    %1790 = vsyncpa %s1789, 1

</llo_original>
